<compile_context>
chip_gen: v6e
topology: v6e:2x2x1
jax: 0.10.0
libtpu: 0.0.40
codegen_flags: <defaults>
</compile_context>

<pallas_src>
import functools

import numpy as np

import jax
import jax.numpy as jnp
from jax import lax
from jax.experimental import pallas as pl
from jax.experimental.pallas import tpu as pltpu


def _round_up(x, m):
    return (x + m - 1) // m * m


# ---------------------------------------------------------------------------
# Fused kernel: per-row-block FIR prologue + tiled causal FIR convolution
# ---------------------------------------------------------------------------
def iir_fsm_fused_kernel(bs_ref, as_ref, dr_ref, di_ref, basis_ref, xpad_ref,
                         y_ref, fir_ref, *, num_biquads, n_bins, fir_len,
                         pad_left):
    # bs_ref / as_ref : (ROWS, 3*K)        biquad coefficients for this block
    # dr_ref / di_ref : (3, NHP)           Re / Im of z^{-i} at padded bins
    # basis_ref       : (2*NHP, NPAD)      stacked real-irfft basis (matmul)
    # xpad_ref        : (ROWS, PADL+Lc)    padded input rows (VMEM resident)
    # y_ref           : (ROWS, T)          output time tile
    # fir_ref         : (ROWS, NPAD)       VMEM scratch, persists across t
    t = pl.program_id(1)
    rows, tile = y_ref.shape

    # ---- FIR prologue: once per row block -------------------------------
    @pl.when(t == 0)
    def _compute_fir():
        dr = dr_ref[...]
        di = di_ref[...]
        nhp = dr.shape[1]
        bs = bs_ref[...]
        as_ = as_ref[...]
        # Padded bins (f >= n_bins) have dr = di = 0; add 1 to den_r there so
        # the complex division is finite and the padded response is exactly 0
        # (no NaN can reach the irfft matmul).
        pad_bias = (lax.broadcasted_iota(jnp.int32, (1, nhp), 1)
                    >= n_bins).astype(jnp.float32)
        dr0, dr1, dr2 = dr[0:1, :], dr[1:2, :], dr[2:3, :]
        di0, di1, di2 = di[0:1, :], di[1:2, :], di[2:3, :]

        acc_r = None
        acc_i = None
        for k in range(num_biquads):          # static unroll, pure VPU work
            b0 = bs[:, 3 * k + 0:3 * k + 1]
            b1 = bs[:, 3 * k + 1:3 * k + 2]
            b2 = bs[:, 3 * k + 2:3 * k + 3]
            a0 = as_[:, 3 * k + 0:3 * k + 1]
            a1 = as_[:, 3 * k + 1:3 * k + 2]
            a2 = as_[:, 3 * k + 2:3 * k + 3]
            num_r = b0 * dr0 + b1 * dr1 + b2 * dr2
            num_i = b0 * di0 + b1 * di1 + b2 * di2
            den_r = a0 * dr0 + a1 * dr1 + a2 * dr2 + pad_bias
            den_i = a0 * di0 + a1 * di1 + a2 * di2
            inv = 1.0 / (den_r * den_r + den_i * den_i)   # exact (feeds 1e-3)
            rr = (num_r * den_r + num_i * den_i) * inv
            ri = (num_i * den_r - num_r * den_i) * inv
            if k == 0:
                acc_r, acc_i = rr, ri
            else:
                acc_r, acc_i = (acc_r * rr - acc_i * ri,
                                acc_r * ri + acc_i * rr)

        # irfft(n=N) as ONE matmul: [Re | Im] @ [w*cos ; -w*sin]   (MXU)
        resp = jnp.concatenate([acc_r, acc_i], axis=1)      # (rows, 2*NHP)
        fir_ref[...] = jnp.dot(resp, basis_ref[...],
                               preferred_element_type=jnp.float32,
                               precision=lax.Precision.HIGHEST)

    # ---- causal FIR convolution for this (row block, time tile) ----------
    fir = fir_ref[...]                                      # (rows, NPAD)
    base = pl.multiple_of(t * tile, 128)                    # aligned offset
    # One aligned VMEM load of the needed window (pad_left + tile lanes);
    # the fir_len shifted views below are static slices of this value (lane
    # rotates on the XLU instead of repeated unaligned VMEM loads).
    xwin = xpad_ref[:, pl.ds(base, pad_left + tile)]
    acc = jnp.zeros((rows, tile), jnp.float32)
    for m in range(fir_len):                                # static unroll
        win = xwin[:, pad_left - m:pad_left - m + tile]
        acc = acc + fir[:, m:m + 1] * win
    y_ref[...] = acc


# ---------------------------------------------------------------------------
# Wrapper == IIRFilter(order=2, backend="fsm", fsm_fir_len=N).forward
# ---------------------------------------------------------------------------
def iir_filter_fsm(x, Bs, As, *, fsm_fir_len=64, rows_per_block=8,
                   time_tile=1024):
    """x: (B, C_in, L) float32; Bs, As: (B, C_f, K, 3). Returns (B, C, L)."""
    B, C_in, L = x.shape
    _, C_f, K, _ = Bs.shape
    N = fsm_fir_len
    assert N % 2 == 0                  # flashfftconv assert in the reference
    Nh = N // 2 + 1

    # channel broadcasting (same rules as the reference module)
    C = max(C_in, C_f)
    if C_in == 1 and C_f > 1:
        x = jnp.broadcast_to(x, (B, C, L))
    elif C_f == 1 and C_in > 1:
        Bs = jnp.broadcast_to(Bs, (B, C, K, 3))
        As = jnp.broadcast_to(As, (B, C, K, 3))
    else:
        assert C_in == C_f

    # ---- lane/sublane-dense padded layout ---------------------------------
    ROWS = rows_per_block                       # (b,c) rows per grid step
    BC = B * C
    BC_pad = _round_up(BC, ROWS)
    NHP = _round_up(Nh, 128)                    # padded frequency bins
    NPAD = _round_up(N, 128)                    # padded FIR tap lanes
    PADL = _round_up(max(N - 1, 1), 128)        # aligned causal left pad
    T = min(_round_up(time_tile, 128), _round_up(L, 128))   # time tile
    num_t = -(-L // T)
    L_ceil = num_t * T

    # coefficients (BC_pad, 3*K); padded rows get a0 = 1 -> response exactly 0
    Bs2 = Bs.reshape(BC, K, 3).astype(jnp.float32)
    As2 = As.reshape(BC, K, 3).astype(jnp.float32)
    if BC_pad != BC:
        pad = BC_pad - BC
        Bs2 = jnp.concatenate([Bs2, jnp.zeros((pad, K, 3), jnp.float32)], 0)
        a_pad = jnp.zeros((pad, K, 3), jnp.float32).at[:, :, 0].set(1.0)
        As2 = jnp.concatenate([As2, a_pad], 0)
    Bs2 = Bs2.reshape(BC_pad, 3 * K)
    As2 = As2.reshape(BC_pad, 3 * K)

    # input rows, left-padded (causal) and right-padded to the tile grid
    xb = x.reshape(BC, L).astype(jnp.float32)
    xpad = jnp.zeros((BC_pad, PADL + L_ceil), jnp.float32)
    xpad = xpad.at[:BC, PADL:PADL + L].set(xb)

    # ---- constants: z^{-i} at rfft bins + stacked real-irfft basis --------
    i_ = np.arange(3, dtype=np.float64)[:, None]
    f_ = np.arange(Nh, dtype=np.float64)[None, :]
    phase = 2.0 * np.pi * i_ * f_ / N
    drp = np.zeros((3, NHP), np.float32)
    dip = np.zeros((3, NHP), np.float32)
    drp[:, :Nh] = np.cos(phase)
    dip[:, :Nh] = -np.sin(phase)

    w = np.full((Nh,), 2.0 / N)
    w[0] = 1.0 / N
    w[-1] = 1.0 / N
    n_ = np.arange(N, dtype=np.float64)[None, :]
    ang = 2.0 * np.pi * np.arange(Nh, dtype=np.float64)[:, None] * n_ / N
    basis = np.zeros((2 * NHP, NPAD), np.float32)
    basis[:Nh, :N] = w[:, None] * np.cos(ang)
    basis[NHP:NHP + Nh, :N] = -w[:, None] * np.sin(ang)

    drp = jnp.asarray(drp)
    dip = jnp.asarray(dip)
    basis = jnp.asarray(basis)

    # TODO(synk): the tap loop is statically unrolled (fine for short FIRs);
    # the module default fsm_fir_len=4000 would need an fori_loop / FFT-based
    # (overlap-add) convolution path instead.
    kernel = functools.partial(iir_fsm_fused_kernel, num_biquads=K, n_bins=Nh,
                               fir_len=N, pad_left=PADL)
    y = pl.pallas_call(
        kernel,
        out_shape=jax.ShapeDtypeStruct((BC_pad, L_ceil), jnp.float32),
        grid=(BC_pad // ROWS, num_t),
        in_specs=[
            pl.BlockSpec((ROWS, 3 * K), lambda r, t: (r, 0)),    # Bs
            pl.BlockSpec((ROWS, 3 * K), lambda r, t: (r, 0)),    # As
            pl.BlockSpec((3, NHP), lambda r, t: (0, 0)),         # Re delays
            pl.BlockSpec((3, NHP), lambda r, t: (0, 0)),         # Im delays
            pl.BlockSpec((2 * NHP, NPAD), lambda r, t: (0, 0)),  # irfft basis
            pl.BlockSpec((ROWS, PADL + L_ceil), lambda r, t: (r, 0)),  # xpad
        ],
        out_specs=pl.BlockSpec((ROWS, T), lambda r, t: (r, t)),
        scratch_shapes=[pltpu.VMEM((ROWS, NPAD), jnp.float32)],
        compiler_params=pltpu.CompilerParams(
            dimension_semantics=("parallel", "arbitrary")),
    )(Bs2, As2, drp, dip, basis, xpad)

    return y[:BC, :L].reshape(B, C, L)


# ---------------------------------------------------------------------------
# NumPy reference (mirrors the PyTorch module exactly) for self-validation
# ---------------------------------------------------------------------------
def iir_filter_fsm_ref_np(x, Bs, As, *, fsm_fir_len=64):
    x = np.asarray(x, np.float64)
    Bs = np.asarray(Bs, np.float64)
    As = np.asarray(As, np.float64)
    N = fsm_fir_len
    Nh = N // 2 + 1
    i = np.arange(3)[:, None]
    kk = np.arange(Nh)[None, :]
    delays = np.exp(-1j * i * kk * 2.0 * np.pi / N)          # (3, Nh)
    num = np.sum(Bs[..., None] * delays, axis=-2)
    den = np.sum(As[..., None] * delays, axis=-2)
    resp = np.prod(num / den, axis=-2)                        # (B, C, Nh)
    fir = np.fft.irfft(resp, n=N, axis=-1)                    # (B, C, N)
    B, C, L = x.shape
    y = np.zeros_like(x)
    for b in range(B):
        for c in range(C):
            y[b, c] = np.convolve(x[b, c], fir[b, c], mode="full")[:L]
    return y


if __name__ == "__main__":
    B, C, K, L = 2, 2, 2, 384
    FIR_LEN = 64  # fsm_fir_len (small, even — flashfftconv assert satisfied)

    key = jax.random.PRNGKey(0)
    k1, k2, k3 = jax.random.split(key, 3)
    x = jax.random.normal(k1, (B, C, L), jnp.float32)
    Bs = 0.5 * jax.random.normal(k2, (B, C, K, 3), jnp.float32)
    a12 = 0.2 * jax.random.normal(k3, (B, C, K, 2), jnp.float32)
    As = jnp.concatenate([jnp.ones((B, C, K, 1), jnp.float32), a12], axis=-1)

    # time_tile=128 exercises the multi-tile time grid at this small L
    y = iir_filter_fsm(x, Bs, As, fsm_fir_len=FIR_LEN, time_tile=128)
    y = jax.block_until_ready(y)

    y_ref = iir_filter_fsm_ref_np(x, Bs, As, fsm_fir_len=FIR_LEN)
    err = float(np.max(np.abs(np.asarray(y) - y_ref)))
    tol = 1e-3 * max(1.0, float(np.max(np.abs(y_ref))))
    assert y.shape == (B, C, L)
    assert err < tol, f"max abs error too large: {err} (tol {tol})"
    print("KERNEL_OK")
</pallas_src>

<mosaic_0001>
module attributes {stable_mosaic.version = 11 : i64} {
  func.func @iir_fsm_fused_kernel(%arg0: i32, %arg1: i32, %arg2: memref<8x6xf32, #tpu.memory_space<vmem>>, %arg3: memref<8x6xf32, #tpu.memory_space<vmem>>, %arg4: memref<3x128xf32, #tpu.memory_space<vmem>>, %arg5: memref<3x128xf32, #tpu.memory_space<vmem>>, %arg6: memref<256x128xf32, #tpu.memory_space<vmem>>, %arg7: memref<8x512xf32, #tpu.memory_space<vmem>>, %arg8: memref<8x128xf32, #tpu.memory_space<vmem>>, %arg9: memref<8x128xf32, #tpu.memory_space<vmem>>) attributes {dimension_semantics = [#tpu.dimension_semantics<parallel>, #tpu.dimension_semantics<arbitrary>], iteration_bounds = array<i64: 1, 3>, scalar_prefetch = 0 : i64, scratch_operands = 1 : i64, tpu.core_type = #tpu.core_type<tc>, window_params = [{transform_indices = @transform_0, window_bounds = array<i64: 8, 6>}, {transform_indices = @transform_1, window_bounds = array<i64: 8, 6>}, {pipeline_mode = #tpu.pipeline_mode<synchronous>, transform_indices = @transform_2, window_bounds = array<i64: 3, 128>}, {pipeline_mode = #tpu.pipeline_mode<synchronous>, transform_indices = @transform_3, window_bounds = array<i64: 3, 128>}, {pipeline_mode = #tpu.pipeline_mode<synchronous>, transform_indices = @transform_4, window_bounds = array<i64: 256, 128>}, {transform_indices = @transform_5, window_bounds = array<i64: 8, 512>}, {transform_indices = @transform_6, window_bounds = array<i64: 8, 128>}]} {
    %c0_i32 = arith.constant 0 : i32
    %0 = arith.cmpi eq, %arg1, %c0_i32 : i32
    %1 = arith.extui %0 : i1 to i32
    %c0_i32_0 = arith.constant 0 : i32
    %2 = arith.cmpi ne, %1, %c0_i32_0 : i32
    scf.if %2 {
      %c0_5 = arith.constant 0 : index
      %c0_6 = arith.constant 0 : index
      %330 = vector.load %arg4[%c0_5, %c0_6] : memref<3x128xf32, #tpu.memory_space<vmem>>, vector<3x128xf32>
      %c0_7 = arith.constant 0 : index
      %c0_8 = arith.constant 0 : index
      %331 = vector.load %arg5[%c0_7, %c0_8] : memref<3x128xf32, #tpu.memory_space<vmem>>, vector<3x128xf32>
      %c0_9 = arith.constant 0 : index
      %c0_10 = arith.constant 0 : index
      %332 = vector.load %arg2[%c0_9, %c0_10] : memref<8x6xf32, #tpu.memory_space<vmem>>, vector<8x6xf32>
      %c0_11 = arith.constant 0 : index
      %c0_12 = arith.constant 0 : index
      %333 = vector.load %arg3[%c0_11, %c0_12] : memref<8x6xf32, #tpu.memory_space<vmem>>, vector<8x6xf32>
      %334 = tpu.iota {dimensions = array<i32: 1>} : vector<1x128xi32>
      %c33_i32 = arith.constant 33 : i32
      %335 = vector.broadcast %c33_i32 : i32 to vector<1x128xi32>
      %336 = arith.cmpi sge, %334, %335 : vector<1x128xi32>
      %337 = arith.extui %336 : vector<1x128xi1> to vector<1x128xi32>
      %338 = arith.sitofp %337 : vector<1x128xi32> to vector<1x128xf32>
      %339 = vector.extract_strided_slice %330 {offsets = [0, 0], sizes = [1, 128], strides = [1, 1]} : vector<3x128xf32> to vector<1x128xf32>
      %340 = vector.extract_strided_slice %330 {offsets = [1, 0], sizes = [1, 128], strides = [1, 1]} : vector<3x128xf32> to vector<1x128xf32>
      %341 = vector.extract_strided_slice %330 {offsets = [2, 0], sizes = [1, 128], strides = [1, 1]} : vector<3x128xf32> to vector<1x128xf32>
      %342 = vector.extract_strided_slice %331 {offsets = [0, 0], sizes = [1, 128], strides = [1, 1]} : vector<3x128xf32> to vector<1x128xf32>
      %343 = vector.extract_strided_slice %331 {offsets = [1, 0], sizes = [1, 128], strides = [1, 1]} : vector<3x128xf32> to vector<1x128xf32>
      %344 = vector.extract_strided_slice %331 {offsets = [2, 0], sizes = [1, 128], strides = [1, 1]} : vector<3x128xf32> to vector<1x128xf32>
      %345 = vector.extract_strided_slice %332 {offsets = [0, 0], sizes = [8, 1], strides = [1, 1]} : vector<8x6xf32> to vector<8x1xf32>
      %346 = vector.extract_strided_slice %332 {offsets = [0, 1], sizes = [8, 1], strides = [1, 1]} : vector<8x6xf32> to vector<8x1xf32>
      %347 = vector.extract_strided_slice %332 {offsets = [0, 2], sizes = [8, 1], strides = [1, 1]} : vector<8x6xf32> to vector<8x1xf32>
      %348 = vector.extract_strided_slice %333 {offsets = [0, 0], sizes = [8, 1], strides = [1, 1]} : vector<8x6xf32> to vector<8x1xf32>
      %349 = vector.extract_strided_slice %333 {offsets = [0, 1], sizes = [8, 1], strides = [1, 1]} : vector<8x6xf32> to vector<8x1xf32>
      %350 = vector.extract_strided_slice %333 {offsets = [0, 2], sizes = [8, 1], strides = [1, 1]} : vector<8x6xf32> to vector<8x1xf32>
      %351 = vector.broadcast %345 : vector<8x1xf32> to vector<8x128xf32>
      %352 = vector.broadcast %339 : vector<1x128xf32> to vector<8x128xf32>
      %353 = arith.mulf %351, %352 : vector<8x128xf32>
      %354 = vector.broadcast %346 : vector<8x1xf32> to vector<8x128xf32>
      %355 = vector.broadcast %340 : vector<1x128xf32> to vector<8x128xf32>
      %356 = arith.mulf %354, %355 : vector<8x128xf32>
      %357 = arith.addf %353, %356 : vector<8x128xf32>
      %358 = vector.broadcast %347 : vector<8x1xf32> to vector<8x128xf32>
      %359 = vector.broadcast %341 : vector<1x128xf32> to vector<8x128xf32>
      %360 = arith.mulf %358, %359 : vector<8x128xf32>
      %361 = arith.addf %357, %360 : vector<8x128xf32>
      %362 = vector.broadcast %345 : vector<8x1xf32> to vector<8x128xf32>
      %363 = vector.broadcast %342 : vector<1x128xf32> to vector<8x128xf32>
      %364 = arith.mulf %362, %363 : vector<8x128xf32>
      %365 = vector.broadcast %346 : vector<8x1xf32> to vector<8x128xf32>
      %366 = vector.broadcast %343 : vector<1x128xf32> to vector<8x128xf32>
      %367 = arith.mulf %365, %366 : vector<8x128xf32>
      %368 = arith.addf %364, %367 : vector<8x128xf32>
      %369 = vector.broadcast %347 : vector<8x1xf32> to vector<8x128xf32>
      %370 = vector.broadcast %344 : vector<1x128xf32> to vector<8x128xf32>
      %371 = arith.mulf %369, %370 : vector<8x128xf32>
      %372 = arith.addf %368, %371 : vector<8x128xf32>
      %373 = vector.broadcast %348 : vector<8x1xf32> to vector<8x128xf32>
      %374 = vector.broadcast %339 : vector<1x128xf32> to vector<8x128xf32>
      %375 = arith.mulf %373, %374 : vector<8x128xf32>
      %376 = vector.broadcast %349 : vector<8x1xf32> to vector<8x128xf32>
      %377 = vector.broadcast %340 : vector<1x128xf32> to vector<8x128xf32>
      %378 = arith.mulf %376, %377 : vector<8x128xf32>
      %379 = arith.addf %375, %378 : vector<8x128xf32>
      %380 = vector.broadcast %350 : vector<8x1xf32> to vector<8x128xf32>
      %381 = vector.broadcast %341 : vector<1x128xf32> to vector<8x128xf32>
      %382 = arith.mulf %380, %381 : vector<8x128xf32>
      %383 = arith.addf %379, %382 : vector<8x128xf32>
      %384 = vector.broadcast %338 : vector<1x128xf32> to vector<8x128xf32>
      %385 = arith.addf %383, %384 : vector<8x128xf32>
      %386 = vector.broadcast %348 : vector<8x1xf32> to vector<8x128xf32>
      %387 = vector.broadcast %342 : vector<1x128xf32> to vector<8x128xf32>
      %388 = arith.mulf %386, %387 : vector<8x128xf32>
      %389 = vector.broadcast %349 : vector<8x1xf32> to vector<8x128xf32>
      %390 = vector.broadcast %343 : vector<1x128xf32> to vector<8x128xf32>
      %391 = arith.mulf %389, %390 : vector<8x128xf32>
      %392 = arith.addf %388, %391 : vector<8x128xf32>
      %393 = vector.broadcast %350 : vector<8x1xf32> to vector<8x128xf32>
      %394 = vector.broadcast %344 : vector<1x128xf32> to vector<8x128xf32>
      %395 = arith.mulf %393, %394 : vector<8x128xf32>
      %396 = arith.addf %392, %395 : vector<8x128xf32>
      %397 = arith.mulf %385, %385 : vector<8x128xf32>
      %398 = arith.mulf %396, %396 : vector<8x128xf32>
      %399 = arith.addf %397, %398 : vector<8x128xf32>
      %cst_13 = arith.constant 1.000000e+00 : f32
      %400 = vector.broadcast %cst_13 : f32 to vector<8x128xf32>
      %401 = arith.divf %400, %399 : vector<8x128xf32>
      %402 = arith.mulf %361, %385 : vector<8x128xf32>
      %403 = arith.mulf %372, %396 : vector<8x128xf32>
      %404 = arith.addf %402, %403 : vector<8x128xf32>
      %405 = arith.mulf %404, %401 : vector<8x128xf32>
      %406 = arith.mulf %372, %385 : vector<8x128xf32>
      %407 = arith.mulf %361, %396 : vector<8x128xf32>
      %408 = arith.subf %406, %407 : vector<8x128xf32>
      %409 = arith.mulf %408, %401 : vector<8x128xf32>
      %410 = vector.extract_strided_slice %332 {offsets = [0, 3], sizes = [8, 1], strides = [1, 1]} : vector<8x6xf32> to vector<8x1xf32>
      %411 = vector.extract_strided_slice %332 {offsets = [0, 4], sizes = [8, 1], strides = [1, 1]} : vector<8x6xf32> to vector<8x1xf32>
      %412 = vector.extract_strided_slice %332 {offsets = [0, 5], sizes = [8, 1], strides = [1, 1]} : vector<8x6xf32> to vector<8x1xf32>
      %413 = vector.extract_strided_slice %333 {offsets = [0, 3], sizes = [8, 1], strides = [1, 1]} : vector<8x6xf32> to vector<8x1xf32>
      %414 = vector.extract_strided_slice %333 {offsets = [0, 4], sizes = [8, 1], strides = [1, 1]} : vector<8x6xf32> to vector<8x1xf32>
      %415 = vector.extract_strided_slice %333 {offsets = [0, 5], sizes = [8, 1], strides = [1, 1]} : vector<8x6xf32> to vector<8x1xf32>
      %416 = vector.broadcast %410 : vector<8x1xf32> to vector<8x128xf32>
      %417 = vector.broadcast %339 : vector<1x128xf32> to vector<8x128xf32>
      %418 = arith.mulf %416, %417 : vector<8x128xf32>
      %419 = vector.broadcast %411 : vector<8x1xf32> to vector<8x128xf32>
      %420 = vector.broadcast %340 : vector<1x128xf32> to vector<8x128xf32>
      %421 = arith.mulf %419, %420 : vector<8x128xf32>
      %422 = arith.addf %418, %421 : vector<8x128xf32>
      %423 = vector.broadcast %412 : vector<8x1xf32> to vector<8x128xf32>
      %424 = vector.broadcast %341 : vector<1x128xf32> to vector<8x128xf32>
      %425 = arith.mulf %423, %424 : vector<8x128xf32>
      %426 = arith.addf %422, %425 : vector<8x128xf32>
      %427 = vector.broadcast %410 : vector<8x1xf32> to vector<8x128xf32>
      %428 = vector.broadcast %342 : vector<1x128xf32> to vector<8x128xf32>
      %429 = arith.mulf %427, %428 : vector<8x128xf32>
      %430 = vector.broadcast %411 : vector<8x1xf32> to vector<8x128xf32>
      %431 = vector.broadcast %343 : vector<1x128xf32> to vector<8x128xf32>
      %432 = arith.mulf %430, %431 : vector<8x128xf32>
      %433 = arith.addf %429, %432 : vector<8x128xf32>
      %434 = vector.broadcast %412 : vector<8x1xf32> to vector<8x128xf32>
      %435 = vector.broadcast %344 : vector<1x128xf32> to vector<8x128xf32>
      %436 = arith.mulf %434, %435 : vector<8x128xf32>
      %437 = arith.addf %433, %436 : vector<8x128xf32>
      %438 = vector.broadcast %413 : vector<8x1xf32> to vector<8x128xf32>
      %439 = vector.broadcast %339 : vector<1x128xf32> to vector<8x128xf32>
      %440 = arith.mulf %438, %439 : vector<8x128xf32>
      %441 = vector.broadcast %414 : vector<8x1xf32> to vector<8x128xf32>
      %442 = vector.broadcast %340 : vector<1x128xf32> to vector<8x128xf32>
      %443 = arith.mulf %441, %442 : vector<8x128xf32>
      %444 = arith.addf %440, %443 : vector<8x128xf32>
      %445 = vector.broadcast %415 : vector<8x1xf32> to vector<8x128xf32>
      %446 = vector.broadcast %341 : vector<1x128xf32> to vector<8x128xf32>
      %447 = arith.mulf %445, %446 : vector<8x128xf32>
      %448 = arith.addf %444, %447 : vector<8x128xf32>
      %449 = vector.broadcast %338 : vector<1x128xf32> to vector<8x128xf32>
      %450 = arith.addf %448, %449 : vector<8x128xf32>
      %451 = vector.broadcast %413 : vector<8x1xf32> to vector<8x128xf32>
      %452 = vector.broadcast %342 : vector<1x128xf32> to vector<8x128xf32>
      %453 = arith.mulf %451, %452 : vector<8x128xf32>
      %454 = vector.broadcast %414 : vector<8x1xf32> to vector<8x128xf32>
      %455 = vector.broadcast %343 : vector<1x128xf32> to vector<8x128xf32>
      %456 = arith.mulf %454, %455 : vector<8x128xf32>
      %457 = arith.addf %453, %456 : vector<8x128xf32>
      %458 = vector.broadcast %415 : vector<8x1xf32> to vector<8x128xf32>
      %459 = vector.broadcast %344 : vector<1x128xf32> to vector<8x128xf32>
      %460 = arith.mulf %458, %459 : vector<8x128xf32>
      %461 = arith.addf %457, %460 : vector<8x128xf32>
      %462 = arith.mulf %450, %450 : vector<8x128xf32>
      %463 = arith.mulf %461, %461 : vector<8x128xf32>
      %464 = arith.addf %462, %463 : vector<8x128xf32>
      %cst_14 = arith.constant 1.000000e+00 : f32
      %465 = vector.broadcast %cst_14 : f32 to vector<8x128xf32>
      %466 = arith.divf %465, %464 : vector<8x128xf32>
      %467 = arith.mulf %426, %450 : vector<8x128xf32>
      %468 = arith.mulf %437, %461 : vector<8x128xf32>
      %469 = arith.addf %467, %468 : vector<8x128xf32>
      %470 = arith.mulf %469, %466 : vector<8x128xf32>
      %471 = arith.mulf %437, %450 : vector<8x128xf32>
      %472 = arith.mulf %426, %461 : vector<8x128xf32>
      %473 = arith.subf %471, %472 : vector<8x128xf32>
      %474 = arith.mulf %473, %466 : vector<8x128xf32>
      %475 = arith.mulf %405, %470 : vector<8x128xf32>
      %476 = arith.mulf %409, %474 : vector<8x128xf32>
      %477 = arith.subf %475, %476 : vector<8x128xf32>
      %478 = arith.mulf %405, %474 : vector<8x128xf32>
      %479 = arith.mulf %409, %470 : vector<8x128xf32>
      %480 = arith.addf %478, %479 : vector<8x128xf32>
      %481 = tpu.concatenate %477, %480 in 1 : vector<8x128xf32>, vector<8x128xf32> -> vector<8x256xf32>
      %c0_15 = arith.constant 0 : index
      %c0_16 = arith.constant 0 : index
      %482 = vector.load %arg6[%c0_15, %c0_16] : memref<256x128xf32, #tpu.memory_space<vmem>>, vector<256x128xf32>
      %cst_17 = arith.constant dense<0.000000e+00> : vector<8x128xf32>
      %483 = tpu.matmul %481, %482, %cst_17 {dimension_numbers = #tpu.dot_dimension_numbers<[1], [0], [0], [1], [0, 0, 1, 1], [], []>, precision = #tpu.contract_precision<fp32>} : vector<8x256xf32>, vector<256x128xf32>, vector<8x128xf32> -> vector<8x128xf32>
      %c0_18 = arith.constant 0 : index
      %c0_19 = arith.constant 0 : index
      %484 = vector.load %arg9[%c0_18, %c0_19] : memref<8x128xf32, #tpu.memory_space<vmem>>, vector<8x128xf32>
      tpu.vector_store %arg9[%c0_18, %c0_19], %483 {strides = array<i32>} : memref<8x128xf32, #tpu.memory_space<vmem>>, vector<8x128xf32>,
    } else {
    }
    %c0 = arith.constant 0 : index
    %c0_1 = arith.constant 0 : index
    %3 = vector.load %arg9[%c0, %c0_1] : memref<8x128xf32, #tpu.memory_space<vmem>>, vector<8x128xf32>
    %c128_i32 = arith.constant 128 : i32
    %4 = arith.muli %arg1, %c128_i32 : i32
    %5 = tpu.assume_multiple %4, 128 : i32
    %c0_2 = arith.constant 0 : index
    %6 = arith.index_cast %5 : i32 to index
    %7 = vector.load %arg7[%c0_2, %6] : memref<8x512xf32, #tpu.memory_space<vmem>>, vector<8x256xf32>
    %cst = arith.constant 0.000000e+00 : f32
    %8 = vector.broadcast %cst : f32 to vector<8x128xf32>
    %9 = vector.extract_strided_slice %7 {offsets = [0, 128], sizes = [8, 128], strides = [1, 1]} : vector<8x256xf32> to vector<8x128xf32>
    %10 = vector.extract_strided_slice %3 {offsets = [0, 0], sizes = [8, 1], strides = [1, 1]} : vector<8x128xf32> to vector<8x1xf32>
    %11 = vector.broadcast %10 : vector<8x1xf32> to vector<8x128xf32>
    %12 = arith.mulf %11, %9 : vector<8x128xf32>
    %13 = arith.addf %8, %12 : vector<8x128xf32>
    %14 = vector.extract_strided_slice %7 {offsets = [0, 127], sizes = [8, 128], strides = [1, 1]} : vector<8x256xf32> to vector<8x128xf32>
    %15 = vector.extract_strided_slice %3 {offsets = [0, 1], sizes = [8, 1], strides = [1, 1]} : vector<8x128xf32> to vector<8x1xf32>
    %16 = vector.broadcast %15 : vector<8x1xf32> to vector<8x128xf32>
    %17 = arith.mulf %16, %14 : vector<8x128xf32>
    %18 = arith.addf %13, %17 : vector<8x128xf32>
    %19 = vector.extract_strided_slice %7 {offsets = [0, 126], sizes = [8, 128], strides = [1, 1]} : vector<8x256xf32> to vector<8x128xf32>
    %20 = vector.extract_strided_slice %3 {offsets = [0, 2], sizes = [8, 1], strides = [1, 1]} : vector<8x128xf32> to vector<8x1xf32>
    %21 = vector.broadcast %20 : vector<8x1xf32> to vector<8x128xf32>
    %22 = arith.mulf %21, %19 : vector<8x128xf32>
    %23 = arith.addf %18, %22 : vector<8x128xf32>
    %24 = vector.extract_strided_slice %7 {offsets = [0, 125], sizes = [8, 128], strides = [1, 1]} : vector<8x256xf32> to vector<8x128xf32>
    %25 = vector.extract_strided_slice %3 {offsets = [0, 3], sizes = [8, 1], strides = [1, 1]} : vector<8x128xf32> to vector<8x1xf32>
    %26 = vector.broadcast %25 : vector<8x1xf32> to vector<8x128xf32>
    %27 = arith.mulf %26, %24 : vector<8x128xf32>
    %28 = arith.addf %23, %27 : vector<8x128xf32>
    %29 = vector.extract_strided_slice %7 {offsets = [0, 124], sizes = [8, 128], strides = [1, 1]} : vector<8x256xf32> to vector<8x128xf32>
    %30 = vector.extract_strided_slice %3 {offsets = [0, 4], sizes = [8, 1], strides = [1, 1]} : vector<8x128xf32> to vector<8x1xf32>
    %31 = vector.broadcast %30 : vector<8x1xf32> to vector<8x128xf32>
    %32 = arith.mulf %31, %29 : vector<8x128xf32>
    %33 = arith.addf %28, %32 : vector<8x128xf32>
    %34 = vector.extract_strided_slice %7 {offsets = [0, 123], sizes = [8, 128], strides = [1, 1]} : vector<8x256xf32> to vector<8x128xf32>
    %35 = vector.extract_strided_slice %3 {offsets = [0, 5], sizes = [8, 1], strides = [1, 1]} : vector<8x128xf32> to vector<8x1xf32>
    %36 = vector.broadcast %35 : vector<8x1xf32> to vector<8x128xf32>
    %37 = arith.mulf %36, %34 : vector<8x128xf32>
    %38 = arith.addf %33, %37 : vector<8x128xf32>
    %39 = vector.extract_strided_slice %7 {offsets = [0, 122], sizes = [8, 128], strides = [1, 1]} : vector<8x256xf32> to vector<8x128xf32>
    %40 = vector.extract_strided_slice %3 {offsets = [0, 6], sizes = [8, 1], strides = [1, 1]} : vector<8x128xf32> to vector<8x1xf32>
    %41 = vector.broadcast %40 : vector<8x1xf32> to vector<8x128xf32>
    %42 = arith.mulf %41, %39 : vector<8x128xf32>
    %43 = arith.addf %38, %42 : vector<8x128xf32>
    %44 = vector.extract_strided_slice %7 {offsets = [0, 121], sizes = [8, 128], strides = [1, 1]} : vector<8x256xf32> to vector<8x128xf32>
    %45 = vector.extract_strided_slice %3 {offsets = [0, 7], sizes = [8, 1], strides = [1, 1]} : vector<8x128xf32> to vector<8x1xf32>
    %46 = vector.broadcast %45 : vector<8x1xf32> to vector<8x128xf32>
    %47 = arith.mulf %46, %44 : vector<8x128xf32>
    %48 = arith.addf %43, %47 : vector<8x128xf32>
    %49 = vector.extract_strided_slice %7 {offsets = [0, 120], sizes = [8, 128], strides = [1, 1]} : vector<8x256xf32> to vector<8x128xf32>
    %50 = vector.extract_strided_slice %3 {offsets = [0, 8], sizes = [8, 1], strides = [1, 1]} : vector<8x128xf32> to vector<8x1xf32>
    %51 = vector.broadcast %50 : vector<8x1xf32> to vector<8x128xf32>
    %52 = arith.mulf %51, %49 : vector<8x128xf32>
    %53 = arith.addf %48, %52 : vector<8x128xf32>
    %54 = vector.extract_strided_slice %7 {offsets = [0, 119], sizes = [8, 128], strides = [1, 1]} : vector<8x256xf32> to vector<8x128xf32>
    %55 = vector.extract_strided_slice %3 {offsets = [0, 9], sizes = [8, 1], strides = [1, 1]} : vector<8x128xf32> to vector<8x1xf32>
    %56 = vector.broadcast %55 : vector<8x1xf32> to vector<8x128xf32>
    %57 = arith.mulf %56, %54 : vector<8x128xf32>
    %58 = arith.addf %53, %57 : vector<8x128xf32>
    %59 = vector.extract_strided_slice %7 {offsets = [0, 118], sizes = [8, 128], strides = [1, 1]} : vector<8x256xf32> to vector<8x128xf32>
    %60 = vector.extract_strided_slice %3 {offsets = [0, 10], sizes = [8, 1], strides = [1, 1]} : vector<8x128xf32> to vector<8x1xf32>
    %61 = vector.broadcast %60 : vector<8x1xf32> to vector<8x128xf32>
    %62 = arith.mulf %61, %59 : vector<8x128xf32>
    %63 = arith.addf %58, %62 : vector<8x128xf32>
    %64 = vector.extract_strided_slice %7 {offsets = [0, 117], sizes = [8, 128], strides = [1, 1]} : vector<8x256xf32> to vector<8x128xf32>
    %65 = vector.extract_strided_slice %3 {offsets = [0, 11], sizes = [8, 1], strides = [1, 1]} : vector<8x128xf32> to vector<8x1xf32>
    %66 = vector.broadcast %65 : vector<8x1xf32> to vector<8x128xf32>
    %67 = arith.mulf %66, %64 : vector<8x128xf32>
    %68 = arith.addf %63, %67 : vector<8x128xf32>
    %69 = vector.extract_strided_slice %7 {offsets = [0, 116], sizes = [8, 128], strides = [1, 1]} : vector<8x256xf32> to vector<8x128xf32>
    %70 = vector.extract_strided_slice %3 {offsets = [0, 12], sizes = [8, 1], strides = [1, 1]} : vector<8x128xf32> to vector<8x1xf32>
    %71 = vector.broadcast %70 : vector<8x1xf32> to vector<8x128xf32>
    %72 = arith.mulf %71, %69 : vector<8x128xf32>
    %73 = arith.addf %68, %72 : vector<8x128xf32>
    %74 = vector.extract_strided_slice %7 {offsets = [0, 115], sizes = [8, 128], strides = [1, 1]} : vector<8x256xf32> to vector<8x128xf32>
    %75 = vector.extract_strided_slice %3 {offsets = [0, 13], sizes = [8, 1], strides = [1, 1]} : vector<8x128xf32> to vector<8x1xf32>
    %76 = vector.broadcast %75 : vector<8x1xf32> to vector<8x128xf32>
    %77 = arith.mulf %76, %74 : vector<8x128xf32>
    %78 = arith.addf %73, %77 : vector<8x128xf32>
    %79 = vector.extract_strided_slice %7 {offsets = [0, 114], sizes = [8, 128], strides = [1, 1]} : vector<8x256xf32> to vector<8x128xf32>
    %80 = vector.extract_strided_slice %3 {offsets = [0, 14], sizes = [8, 1], strides = [1, 1]} : vector<8x128xf32> to vector<8x1xf32>
    %81 = vector.broadcast %80 : vector<8x1xf32> to vector<8x128xf32>
    %82 = arith.mulf %81, %79 : vector<8x128xf32>
    %83 = arith.addf %78, %82 : vector<8x128xf32>
    %84 = vector.extract_strided_slice %7 {offsets = [0, 113], sizes = [8, 128], strides = [1, 1]} : vector<8x256xf32> to vector<8x128xf32>
    %85 = vector.extract_strided_slice %3 {offsets = [0, 15], sizes = [8, 1], strides = [1, 1]} : vector<8x128xf32> to vector<8x1xf32>
    %86 = vector.broadcast %85 : vector<8x1xf32> to vector<8x128xf32>
    %87 = arith.mulf %86, %84 : vector<8x128xf32>
    %88 = arith.addf %83, %87 : vector<8x128xf32>
    %89 = vector.extract_strided_slice %7 {offsets = [0, 112], sizes = [8, 128], strides = [1, 1]} : vector<8x256xf32> to vector<8x128xf32>
    %90 = vector.extract_strided_slice %3 {offsets = [0, 16], sizes = [8, 1], strides = [1, 1]} : vector<8x128xf32> to vector<8x1xf32>
    %91 = vector.broadcast %90 : vector<8x1xf32> to vector<8x128xf32>
    %92 = arith.mulf %91, %89 : vector<8x128xf32>
    %93 = arith.addf %88, %92 : vector<8x128xf32>
    %94 = vector.extract_strided_slice %7 {offsets = [0, 111], sizes = [8, 128], strides = [1, 1]} : vector<8x256xf32> to vector<8x128xf32>
    %95 = vector.extract_strided_slice %3 {offsets = [0, 17], sizes = [8, 1], strides = [1, 1]} : vector<8x128xf32> to vector<8x1xf32>
    %96 = vector.broadcast %95 : vector<8x1xf32> to vector<8x128xf32>
    %97 = arith.mulf %96, %94 : vector<8x128xf32>
    %98 = arith.addf %93, %97 : vector<8x128xf32>
    %99 = vector.extract_strided_slice %7 {offsets = [0, 110], sizes = [8, 128], strides = [1, 1]} : vector<8x256xf32> to vector<8x128xf32>
    %100 = vector.extract_strided_slice %3 {offsets = [0, 18], sizes = [8, 1], strides = [1, 1]} : vector<8x128xf32> to vector<8x1xf32>
    %101 = vector.broadcast %100 : vector<8x1xf32> to vector<8x128xf32>
    %102 = arith.mulf %101, %99 : vector<8x128xf32>
    %103 = arith.addf %98, %102 : vector<8x128xf32>
    %104 = vector.extract_strided_slice %7 {offsets = [0, 109], sizes = [8, 128], strides = [1, 1]} : vector<8x256xf32> to vector<8x128xf32>
    %105 = vector.extract_strided_slice %3 {offsets = [0, 19], sizes = [8, 1], strides = [1, 1]} : vector<8x128xf32> to vector<8x1xf32>
    %106 = vector.broadcast %105 : vector<8x1xf32> to vector<8x128xf32>
    %107 = arith.mulf %106, %104 : vector<8x128xf32>
    %108 = arith.addf %103, %107 : vector<8x128xf32>
    %109 = vector.extract_strided_slice %7 {offsets = [0, 108], sizes = [8, 128], strides = [1, 1]} : vector<8x256xf32> to vector<8x128xf32>
    %110 = vector.extract_strided_slice %3 {offsets = [0, 20], sizes = [8, 1], strides = [1, 1]} : vector<8x128xf32> to vector<8x1xf32>
    %111 = vector.broadcast %110 : vector<8x1xf32> to vector<8x128xf32>
    %112 = arith.mulf %111, %109 : vector<8x128xf32>
    %113 = arith.addf %108, %112 : vector<8x128xf32>
    %114 = vector.extract_strided_slice %7 {offsets = [0, 107], sizes = [8, 128], strides = [1, 1]} : vector<8x256xf32> to vector<8x128xf32>
    %115 = vector.extract_strided_slice %3 {offsets = [0, 21], sizes = [8, 1], strides = [1, 1]} : vector<8x128xf32> to vector<8x1xf32>
    %116 = vector.broadcast %115 : vector<8x1xf32> to vector<8x128xf32>
    %117 = arith.mulf %116, %114 : vector<8x128xf32>
    %118 = arith.addf %113, %117 : vector<8x128xf32>
    %119 = vector.extract_strided_slice %7 {offsets = [0, 106], sizes = [8, 128], strides = [1, 1]} : vector<8x256xf32> to vector<8x128xf32>
    %120 = vector.extract_strided_slice %3 {offsets = [0, 22], sizes = [8, 1], strides = [1, 1]} : vector<8x128xf32> to vector<8x1xf32>
    %121 = vector.broadcast %120 : vector<8x1xf32> to vector<8x128xf32>
    %122 = arith.mulf %121, %119 : vector<8x128xf32>
    %123 = arith.addf %118, %122 : vector<8x128xf32>
    %124 = vector.extract_strided_slice %7 {offsets = [0, 105], sizes = [8, 128], strides = [1, 1]} : vector<8x256xf32> to vector<8x128xf32>
    %125 = vector.extract_strided_slice %3 {offsets = [0, 23], sizes = [8, 1], strides = [1, 1]} : vector<8x128xf32> to vector<8x1xf32>
    %126 = vector.broadcast %125 : vector<8x1xf32> to vector<8x128xf32>
    %127 = arith.mulf %126, %124 : vector<8x128xf32>
    %128 = arith.addf %123, %127 : vector<8x128xf32>
    %129 = vector.extract_strided_slice %7 {offsets = [0, 104], sizes = [8, 128], strides = [1, 1]} : vector<8x256xf32> to vector<8x128xf32>
    %130 = vector.extract_strided_slice %3 {offsets = [0, 24], sizes = [8, 1], strides = [1, 1]} : vector<8x128xf32> to vector<8x1xf32>
    %131 = vector.broadcast %130 : vector<8x1xf32> to vector<8x128xf32>
    %132 = arith.mulf %131, %129 : vector<8x128xf32>
    %133 = arith.addf %128, %132 : vector<8x128xf32>
    %134 = vector.extract_strided_slice %7 {offsets = [0, 103], sizes = [8, 128], strides = [1, 1]} : vector<8x256xf32> to vector<8x128xf32>
    %135 = vector.extract_strided_slice %3 {offsets = [0, 25], sizes = [8, 1], strides = [1, 1]} : vector<8x128xf32> to vector<8x1xf32>
    %136 = vector.broadcast %135 : vector<8x1xf32> to vector<8x128xf32>
    %137 = arith.mulf %136, %134 : vector<8x128xf32>
    %138 = arith.addf %133, %137 : vector<8x128xf32>
    %139 = vector.extract_strided_slice %7 {offsets = [0, 102], sizes = [8, 128], strides = [1, 1]} : vector<8x256xf32> to vector<8x128xf32>
    %140 = vector.extract_strided_slice %3 {offsets = [0, 26], sizes = [8, 1], strides = [1, 1]} : vector<8x128xf32> to vector<8x1xf32>
    %141 = vector.broadcast %140 : vector<8x1xf32> to vector<8x128xf32>
    %142 = arith.mulf %141, %139 : vector<8x128xf32>
    %143 = arith.addf %138, %142 : vector<8x128xf32>
    %144 = vector.extract_strided_slice %7 {offsets = [0, 101], sizes = [8, 128], strides = [1, 1]} : vector<8x256xf32> to vector<8x128xf32>
    %145 = vector.extract_strided_slice %3 {offsets = [0, 27], sizes = [8, 1], strides = [1, 1]} : vector<8x128xf32> to vector<8x1xf32>
    %146 = vector.broadcast %145 : vector<8x1xf32> to vector<8x128xf32>
    %147 = arith.mulf %146, %144 : vector<8x128xf32>
    %148 = arith.addf %143, %147 : vector<8x128xf32>
    %149 = vector.extract_strided_slice %7 {offsets = [0, 100], sizes = [8, 128], strides = [1, 1]} : vector<8x256xf32> to vector<8x128xf32>
    %150 = vector.extract_strided_slice %3 {offsets = [0, 28], sizes = [8, 1], strides = [1, 1]} : vector<8x128xf32> to vector<8x1xf32>
    %151 = vector.broadcast %150 : vector<8x1xf32> to vector<8x128xf32>
    %152 = arith.mulf %151, %149 : vector<8x128xf32>
    %153 = arith.addf %148, %152 : vector<8x128xf32>
    %154 = vector.extract_strided_slice %7 {offsets = [0, 99], sizes = [8, 128], strides = [1, 1]} : vector<8x256xf32> to vector<8x128xf32>
    %155 = vector.extract_strided_slice %3 {offsets = [0, 29], sizes = [8, 1], strides = [1, 1]} : vector<8x128xf32> to vector<8x1xf32>
    %156 = vector.broadcast %155 : vector<8x1xf32> to vector<8x128xf32>
    %157 = arith.mulf %156, %154 : vector<8x128xf32>
    %158 = arith.addf %153, %157 : vector<8x128xf32>
    %159 = vector.extract_strided_slice %7 {offsets = [0, 98], sizes = [8, 128], strides = [1, 1]} : vector<8x256xf32> to vector<8x128xf32>
    %160 = vector.extract_strided_slice %3 {offsets = [0, 30], sizes = [8, 1], strides = [1, 1]} : vector<8x128xf32> to vector<8x1xf32>
    %161 = vector.broadcast %160 : vector<8x1xf32> to vector<8x128xf32>
    %162 = arith.mulf %161, %159 : vector<8x128xf32>
    %163 = arith.addf %158, %162 : vector<8x128xf32>
    %164 = vector.extract_strided_slice %7 {offsets = [0, 97], sizes = [8, 128], strides = [1, 1]} : vector<8x256xf32> to vector<8x128xf32>
    %165 = vector.extract_strided_slice %3 {offsets = [0, 31], sizes = [8, 1], strides = [1, 1]} : vector<8x128xf32> to vector<8x1xf32>
    %166 = vector.broadcast %165 : vector<8x1xf32> to vector<8x128xf32>
    %167 = arith.mulf %166, %164 : vector<8x128xf32>
    %168 = arith.addf %163, %167 : vector<8x128xf32>
    %169 = vector.extract_strided_slice %7 {offsets = [0, 96], sizes = [8, 128], strides = [1, 1]} : vector<8x256xf32> to vector<8x128xf32>
    %170 = vector.extract_strided_slice %3 {offsets = [0, 32], sizes = [8, 1], strides = [1, 1]} : vector<8x128xf32> to vector<8x1xf32>
    %171 = vector.broadcast %170 : vector<8x1xf32> to vector<8x128xf32>
    %172 = arith.mulf %171, %169 : vector<8x128xf32>
    %173 = arith.addf %168, %172 : vector<8x128xf32>
    %174 = vector.extract_strided_slice %7 {offsets = [0, 95], sizes = [8, 128], strides = [1, 1]} : vector<8x256xf32> to vector<8x128xf32>
    %175 = vector.extract_strided_slice %3 {offsets = [0, 33], sizes = [8, 1], strides = [1, 1]} : vector<8x128xf32> to vector<8x1xf32>
    %176 = vector.broadcast %175 : vector<8x1xf32> to vector<8x128xf32>
    %177 = arith.mulf %176, %174 : vector<8x128xf32>
    %178 = arith.addf %173, %177 : vector<8x128xf32>
    %179 = vector.extract_strided_slice %7 {offsets = [0, 94], sizes = [8, 128], strides = [1, 1]} : vector<8x256xf32> to vector<8x128xf32>
    %180 = vector.extract_strided_slice %3 {offsets = [0, 34], sizes = [8, 1], strides = [1, 1]} : vector<8x128xf32> to vector<8x1xf32>
    %181 = vector.broadcast %180 : vector<8x1xf32> to vector<8x128xf32>
    %182 = arith.mulf %181, %179 : vector<8x128xf32>
    %183 = arith.addf %178, %182 : vector<8x128xf32>
    %184 = vector.extract_strided_slice %7 {offsets = [0, 93], sizes = [8, 128], strides = [1, 1]} : vector<8x256xf32> to vector<8x128xf32>
    %185 = vector.extract_strided_slice %3 {offsets = [0, 35], sizes = [8, 1], strides = [1, 1]} : vector<8x128xf32> to vector<8x1xf32>
    %186 = vector.broadcast %185 : vector<8x1xf32> to vector<8x128xf32>
    %187 = arith.mulf %186, %184 : vector<8x128xf32>
    %188 = arith.addf %183, %187 : vector<8x128xf32>
    %189 = vector.extract_strided_slice %7 {offsets = [0, 92], sizes = [8, 128], strides = [1, 1]} : vector<8x256xf32> to vector<8x128xf32>
    %190 = vector.extract_strided_slice %3 {offsets = [0, 36], sizes = [8, 1], strides = [1, 1]} : vector<8x128xf32> to vector<8x1xf32>
    %191 = vector.broadcast %190 : vector<8x1xf32> to vector<8x128xf32>
    %192 = arith.mulf %191, %189 : vector<8x128xf32>
    %193 = arith.addf %188, %192 : vector<8x128xf32>
    %194 = vector.extract_strided_slice %7 {offsets = [0, 91], sizes = [8, 128], strides = [1, 1]} : vector<8x256xf32> to vector<8x128xf32>
    %195 = vector.extract_strided_slice %3 {offsets = [0, 37], sizes = [8, 1], strides = [1, 1]} : vector<8x128xf32> to vector<8x1xf32>
    %196 = vector.broadcast %195 : vector<8x1xf32> to vector<8x128xf32>
    %197 = arith.mulf %196, %194 : vector<8x128xf32>
    %198 = arith.addf %193, %197 : vector<8x128xf32>
    %199 = vector.extract_strided_slice %7 {offsets = [0, 90], sizes = [8, 128], strides = [1, 1]} : vector<8x256xf32> to vector<8x128xf32>
    %200 = vector.extract_strided_slice %3 {offsets = [0, 38], sizes = [8, 1], strides = [1, 1]} : vector<8x128xf32> to vector<8x1xf32>
    %201 = vector.broadcast %200 : vector<8x1xf32> to vector<8x128xf32>
    %202 = arith.mulf %201, %199 : vector<8x128xf32>
    %203 = arith.addf %198, %202 : vector<8x128xf32>
    %204 = vector.extract_strided_slice %7 {offsets = [0, 89], sizes = [8, 128], strides = [1, 1]} : vector<8x256xf32> to vector<8x128xf32>
    %205 = vector.extract_strided_slice %3 {offsets = [0, 39], sizes = [8, 1], strides = [1, 1]} : vector<8x128xf32> to vector<8x1xf32>
    %206 = vector.broadcast %205 : vector<8x1xf32> to vector<8x128xf32>
    %207 = arith.mulf %206, %204 : vector<8x128xf32>
    %208 = arith.addf %203, %207 : vector<8x128xf32>
    %209 = vector.extract_strided_slice %7 {offsets = [0, 88], sizes = [8, 128], strides = [1, 1]} : vector<8x256xf32> to vector<8x128xf32>
    %210 = vector.extract_strided_slice %3 {offsets = [0, 40], sizes = [8, 1], strides = [1, 1]} : vector<8x128xf32> to vector<8x1xf32>
    %211 = vector.broadcast %210 : vector<8x1xf32> to vector<8x128xf32>
    %212 = arith.mulf %211, %209 : vector<8x128xf32>
    %213 = arith.addf %208, %212 : vector<8x128xf32>
    %214 = vector.extract_strided_slice %7 {offsets = [0, 87], sizes = [8, 128], strides = [1, 1]} : vector<8x256xf32> to vector<8x128xf32>
    %215 = vector.extract_strided_slice %3 {offsets = [0, 41], sizes = [8, 1], strides = [1, 1]} : vector<8x128xf32> to vector<8x1xf32>
    %216 = vector.broadcast %215 : vector<8x1xf32> to vector<8x128xf32>
    %217 = arith.mulf %216, %214 : vector<8x128xf32>
    %218 = arith.addf %213, %217 : vector<8x128xf32>
    %219 = vector.extract_strided_slice %7 {offsets = [0, 86], sizes = [8, 128], strides = [1, 1]} : vector<8x256xf32> to vector<8x128xf32>
    %220 = vector.extract_strided_slice %3 {offsets = [0, 42], sizes = [8, 1], strides = [1, 1]} : vector<8x128xf32> to vector<8x1xf32>
    %221 = vector.broadcast %220 : vector<8x1xf32> to vector<8x128xf32>
    %222 = arith.mulf %221, %219 : vector<8x128xf32>
    %223 = arith.addf %218, %222 : vector<8x128xf32>
    %224 = vector.extract_strided_slice %7 {offsets = [0, 85], sizes = [8, 128], strides = [1, 1]} : vector<8x256xf32> to vector<8x128xf32>
    %225 = vector.extract_strided_slice %3 {offsets = [0, 43], sizes = [8, 1], strides = [1, 1]} : vector<8x128xf32> to vector<8x1xf32>
    %226 = vector.broadcast %225 : vector<8x1xf32> to vector<8x128xf32>
    %227 = arith.mulf %226, %224 : vector<8x128xf32>
    %228 = arith.addf %223, %227 : vector<8x128xf32>
    %229 = vector.extract_strided_slice %7 {offsets = [0, 84], sizes = [8, 128], strides = [1, 1]} : vector<8x256xf32> to vector<8x128xf32>
    %230 = vector.extract_strided_slice %3 {offsets = [0, 44], sizes = [8, 1], strides = [1, 1]} : vector<8x128xf32> to vector<8x1xf32>
    %231 = vector.broadcast %230 : vector<8x1xf32> to vector<8x128xf32>
    %232 = arith.mulf %231, %229 : vector<8x128xf32>
    %233 = arith.addf %228, %232 : vector<8x128xf32>
    %234 = vector.extract_strided_slice %7 {offsets = [0, 83], sizes = [8, 128], strides = [1, 1]} : vector<8x256xf32> to vector<8x128xf32>
    %235 = vector.extract_strided_slice %3 {offsets = [0, 45], sizes = [8, 1], strides = [1, 1]} : vector<8x128xf32> to vector<8x1xf32>
    %236 = vector.broadcast %235 : vector<8x1xf32> to vector<8x128xf32>
    %237 = arith.mulf %236, %234 : vector<8x128xf32>
    %238 = arith.addf %233, %237 : vector<8x128xf32>
    %239 = vector.extract_strided_slice %7 {offsets = [0, 82], sizes = [8, 128], strides = [1, 1]} : vector<8x256xf32> to vector<8x128xf32>
    %240 = vector.extract_strided_slice %3 {offsets = [0, 46], sizes = [8, 1], strides = [1, 1]} : vector<8x128xf32> to vector<8x1xf32>
    %241 = vector.broadcast %240 : vector<8x1xf32> to vector<8x128xf32>
    %242 = arith.mulf %241, %239 : vector<8x128xf32>
    %243 = arith.addf %238, %242 : vector<8x128xf32>
    %244 = vector.extract_strided_slice %7 {offsets = [0, 81], sizes = [8, 128], strides = [1, 1]} : vector<8x256xf32> to vector<8x128xf32>
    %245 = vector.extract_strided_slice %3 {offsets = [0, 47], sizes = [8, 1], strides = [1, 1]} : vector<8x128xf32> to vector<8x1xf32>
    %246 = vector.broadcast %245 : vector<8x1xf32> to vector<8x128xf32>
    %247 = arith.mulf %246, %244 : vector<8x128xf32>
    %248 = arith.addf %243, %247 : vector<8x128xf32>
    %249 = vector.extract_strided_slice %7 {offsets = [0, 80], sizes = [8, 128], strides = [1, 1]} : vector<8x256xf32> to vector<8x128xf32>
    %250 = vector.extract_strided_slice %3 {offsets = [0, 48], sizes = [8, 1], strides = [1, 1]} : vector<8x128xf32> to vector<8x1xf32>
    %251 = vector.broadcast %250 : vector<8x1xf32> to vector<8x128xf32>
    %252 = arith.mulf %251, %249 : vector<8x128xf32>
    %253 = arith.addf %248, %252 : vector<8x128xf32>
    %254 = vector.extract_strided_slice %7 {offsets = [0, 79], sizes = [8, 128], strides = [1, 1]} : vector<8x256xf32> to vector<8x128xf32>
    %255 = vector.extract_strided_slice %3 {offsets = [0, 49], sizes = [8, 1], strides = [1, 1]} : vector<8x128xf32> to vector<8x1xf32>
    %256 = vector.broadcast %255 : vector<8x1xf32> to vector<8x128xf32>
    %257 = arith.mulf %256, %254 : vector<8x128xf32>
    %258 = arith.addf %253, %257 : vector<8x128xf32>
    %259 = vector.extract_strided_slice %7 {offsets = [0, 78], sizes = [8, 128], strides = [1, 1]} : vector<8x256xf32> to vector<8x128xf32>
    %260 = vector.extract_strided_slice %3 {offsets = [0, 50], sizes = [8, 1], strides = [1, 1]} : vector<8x128xf32> to vector<8x1xf32>
    %261 = vector.broadcast %260 : vector<8x1xf32> to vector<8x128xf32>
    %262 = arith.mulf %261, %259 : vector<8x128xf32>
    %263 = arith.addf %258, %262 : vector<8x128xf32>
    %264 = vector.extract_strided_slice %7 {offsets = [0, 77], sizes = [8, 128], strides = [1, 1]} : vector<8x256xf32> to vector<8x128xf32>
    %265 = vector.extract_strided_slice %3 {offsets = [0, 51], sizes = [8, 1], strides = [1, 1]} : vector<8x128xf32> to vector<8x1xf32>
    %266 = vector.broadcast %265 : vector<8x1xf32> to vector<8x128xf32>
    %267 = arith.mulf %266, %264 : vector<8x128xf32>
    %268 = arith.addf %263, %267 : vector<8x128xf32>
    %269 = vector.extract_strided_slice %7 {offsets = [0, 76], sizes = [8, 128], strides = [1, 1]} : vector<8x256xf32> to vector<8x128xf32>
    %270 = vector.extract_strided_slice %3 {offsets = [0, 52], sizes = [8, 1], strides = [1, 1]} : vector<8x128xf32> to vector<8x1xf32>
    %271 = vector.broadcast %270 : vector<8x1xf32> to vector<8x128xf32>
    %272 = arith.mulf %271, %269 : vector<8x128xf32>
    %273 = arith.addf %268, %272 : vector<8x128xf32>
    %274 = vector.extract_strided_slice %7 {offsets = [0, 75], sizes = [8, 128], strides = [1, 1]} : vector<8x256xf32> to vector<8x128xf32>
    %275 = vector.extract_strided_slice %3 {offsets = [0, 53], sizes = [8, 1], strides = [1, 1]} : vector<8x128xf32> to vector<8x1xf32>
    %276 = vector.broadcast %275 : vector<8x1xf32> to vector<8x128xf32>
    %277 = arith.mulf %276, %274 : vector<8x128xf32>
    %278 = arith.addf %273, %277 : vector<8x128xf32>
    %279 = vector.extract_strided_slice %7 {offsets = [0, 74], sizes = [8, 128], strides = [1, 1]} : vector<8x256xf32> to vector<8x128xf32>
    %280 = vector.extract_strided_slice %3 {offsets = [0, 54], sizes = [8, 1], strides = [1, 1]} : vector<8x128xf32> to vector<8x1xf32>
    %281 = vector.broadcast %280 : vector<8x1xf32> to vector<8x128xf32>
    %282 = arith.mulf %281, %279 : vector<8x128xf32>
    %283 = arith.addf %278, %282 : vector<8x128xf32>
    %284 = vector.extract_strided_slice %7 {offsets = [0, 73], sizes = [8, 128], strides = [1, 1]} : vector<8x256xf32> to vector<8x128xf32>
    %285 = vector.extract_strided_slice %3 {offsets = [0, 55], sizes = [8, 1], strides = [1, 1]} : vector<8x128xf32> to vector<8x1xf32>
    %286 = vector.broadcast %285 : vector<8x1xf32> to vector<8x128xf32>
    %287 = arith.mulf %286, %284 : vector<8x128xf32>
    %288 = arith.addf %283, %287 : vector<8x128xf32>
    %289 = vector.extract_strided_slice %7 {offsets = [0, 72], sizes = [8, 128], strides = [1, 1]} : vector<8x256xf32> to vector<8x128xf32>
    %290 = vector.extract_strided_slice %3 {offsets = [0, 56], sizes = [8, 1], strides = [1, 1]} : vector<8x128xf32> to vector<8x1xf32>
    %291 = vector.broadcast %290 : vector<8x1xf32> to vector<8x128xf32>
    %292 = arith.mulf %291, %289 : vector<8x128xf32>
    %293 = arith.addf %288, %292 : vector<8x128xf32>
    %294 = vector.extract_strided_slice %7 {offsets = [0, 71], sizes = [8, 128], strides = [1, 1]} : vector<8x256xf32> to vector<8x128xf32>
    %295 = vector.extract_strided_slice %3 {offsets = [0, 57], sizes = [8, 1], strides = [1, 1]} : vector<8x128xf32> to vector<8x1xf32>
    %296 = vector.broadcast %295 : vector<8x1xf32> to vector<8x128xf32>
    %297 = arith.mulf %296, %294 : vector<8x128xf32>
    %298 = arith.addf %293, %297 : vector<8x128xf32>
    %299 = vector.extract_strided_slice %7 {offsets = [0, 70], sizes = [8, 128], strides = [1, 1]} : vector<8x256xf32> to vector<8x128xf32>
    %300 = vector.extract_strided_slice %3 {offsets = [0, 58], sizes = [8, 1], strides = [1, 1]} : vector<8x128xf32> to vector<8x1xf32>
    %301 = vector.broadcast %300 : vector<8x1xf32> to vector<8x128xf32>
    %302 = arith.mulf %301, %299 : vector<8x128xf32>
    %303 = arith.addf %298, %302 : vector<8x128xf32>
    %304 = vector.extract_strided_slice %7 {offsets = [0, 69], sizes = [8, 128], strides = [1, 1]} : vector<8x256xf32> to vector<8x128xf32>
    %305 = vector.extract_strided_slice %3 {offsets = [0, 59], sizes = [8, 1], strides = [1, 1]} : vector<8x128xf32> to vector<8x1xf32>
    %306 = vector.broadcast %305 : vector<8x1xf32> to vector<8x128xf32>
    %307 = arith.mulf %306, %304 : vector<8x128xf32>
    %308 = arith.addf %303, %307 : vector<8x128xf32>
    %309 = vector.extract_strided_slice %7 {offsets = [0, 68], sizes = [8, 128], strides = [1, 1]} : vector<8x256xf32> to vector<8x128xf32>
    %310 = vector.extract_strided_slice %3 {offsets = [0, 60], sizes = [8, 1], strides = [1, 1]} : vector<8x128xf32> to vector<8x1xf32>
    %311 = vector.broadcast %310 : vector<8x1xf32> to vector<8x128xf32>
    %312 = arith.mulf %311, %309 : vector<8x128xf32>
    %313 = arith.addf %308, %312 : vector<8x128xf32>
    %314 = vector.extract_strided_slice %7 {offsets = [0, 67], sizes = [8, 128], strides = [1, 1]} : vector<8x256xf32> to vector<8x128xf32>
    %315 = vector.extract_strided_slice %3 {offsets = [0, 61], sizes = [8, 1], strides = [1, 1]} : vector<8x128xf32> to vector<8x1xf32>
    %316 = vector.broadcast %315 : vector<8x1xf32> to vector<8x128xf32>
    %317 = arith.mulf %316, %314 : vector<8x128xf32>
    %318 = arith.addf %313, %317 : vector<8x128xf32>
    %319 = vector.extract_strided_slice %7 {offsets = [0, 66], sizes = [8, 128], strides = [1, 1]} : vector<8x256xf32> to vector<8x128xf32>
    %320 = vector.extract_strided_slice %3 {offsets = [0, 62], sizes = [8, 1], strides = [1, 1]} : vector<8x128xf32> to vector<8x1xf32>
    %321 = vector.broadcast %320 : vector<8x1xf32> to vector<8x128xf32>
    %322 = arith.mulf %321, %319 : vector<8x128xf32>
    %323 = arith.addf %318, %322 : vector<8x128xf32>
    %324 = vector.extract_strided_slice %7 {offsets = [0, 65], sizes = [8, 128], strides = [1, 1]} : vector<8x256xf32> to vector<8x128xf32>
    %325 = vector.extract_strided_slice %3 {offsets = [0, 63], sizes = [8, 1], strides = [1, 1]} : vector<8x128xf32> to vector<8x1xf32>
    %326 = vector.broadcast %325 : vector<8x1xf32> to vector<8x128xf32>
    %327 = arith.mulf %326, %324 : vector<8x128xf32>
    %328 = arith.addf %323, %327 : vector<8x128xf32>
    %c0_3 = arith.constant 0 : index
    %c0_4 = arith.constant 0 : index
    %329 = vector.load %arg8[%c0_3, %c0_4] : memref<8x128xf32, #tpu.memory_space<vmem>>, vector<8x128xf32>
    tpu.vector_store %arg8[%c0_3, %c0_4], %328 {strides = array<i32>} : memref<8x128xf32, #tpu.memory_space<vmem>>, vector<8x128xf32>,
    return
  }
  func.func @transform_0(%arg0: i32, %arg1: i32) -> (i32, i32) {
    %c0_i32 = arith.constant 0 : i32
    %c0_i32_0 = arith.constant 0 : i32
    return %arg0, %c0_i32 : i32, i32
  }
  func.func @transform_1(%arg0: i32, %arg1: i32) -> (i32, i32) {
    %c0_i32 = arith.constant 0 : i32
    %c0_i32_0 = arith.constant 0 : i32
    return %arg0, %c0_i32 : i32, i32
  }
  func.func @transform_2(%arg0: i32, %arg1: i32) -> (i32, i32) {
    %c0_i32 = arith.constant 0 : i32
    %c0_i32_0 = arith.constant 0 : i32
    %c0_i32_1 = arith.constant 0 : i32
    return %c0_i32, %c0_i32_0 : i32, i32
  }
  func.func @transform_3(%arg0: i32, %arg1: i32) -> (i32, i32) {
    %c0_i32 = arith.constant 0 : i32
    %c0_i32_0 = arith.constant 0 : i32
    %c0_i32_1 = arith.constant 0 : i32
    return %c0_i32, %c0_i32_0 : i32, i32
  }
  func.func @transform_4(%arg0: i32, %arg1: i32) -> (i32, i32) {
    %c0_i32 = arith.constant 0 : i32
    %c0_i32_0 = arith.constant 0 : i32
    %c0_i32_1 = arith.constant 0 : i32
    return %c0_i32, %c0_i32_0 : i32, i32
  }
  func.func @transform_5(%arg0: i32, %arg1: i32) -> (i32, i32) {
    %c0_i32 = arith.constant 0 : i32
    %c0_i32_0 = arith.constant 0 : i32
    return %arg0, %c0_i32 : i32, i32
  }
  func.func @transform_6(%arg0: i32, %arg1: i32) -> (i32, i32) {
    %c0_i32 = arith.constant 0 : i32
    return %arg0, %arg1 : i32, i32
  }
}

</mosaic_0001>

<llo_original>
// kernel: tpu_custom_call.1
$region0: #{tpu_custom_call.1}
  #allocation0 [shape = 'u32[]', space=smem, size = 0x4, offset = 0x4, fixed_abs, tag = 'smem constant byte address 0x4 - core index']
  #allocation1 [shape = 'u32[144,128]{1,0:T(1,128)}', space=vmem, size = 0x12000, scoped, tag = 'internal scratch']
  #allocation2 [shape = 'f32[8,128]{1,0:T(8,128)}', space=vmem, size = 0x1000, scoped, tag = 'scratch operand']
  %s0 = inlined_call_operand.hbm [shape: f32[8,6], index: 0, kind: input, shape index: {}]
  %s1 = inlined_call_operand.hbm [shape: f32[8,6], index: 1, kind: input, shape index: {}]
  %s2 = inlined_call_operand.hbm [shape: f32[3,128], index: 2, kind: input, shape index: {}]
  %s3 = inlined_call_operand.vmem [shape: f32[3,128], index: 3, kind: input, shape index: {}]
  %s4 = inlined_call_operand.hbm [shape: f32[256,128], index: 4, kind: input, shape index: {}]
  %s5 = inlined_call_operand.hbm [shape: f32[8,512], index: 5, kind: input, shape index: {}]
  %s6 = inlined_call_operand.hbm [shape: f32[8,384], index: 6, kind: output, shape index: {}]
  %s7 = sld [smem:[#allocation0]]
  $region81: #{tpu_custom_call.1} parent=0
    _
  %s9 = ssub.s32 1, %s7
  %s10 = scalar_select 0, %s9, %s7
  $region1: #{tpu_custom_call.1} parent=0
    #allocation3 [shape = 'u8[4096]{0}', space=vmem, size = 0x1000, scoped, tag = 'input window, operand 0, single buffered']
    #allocation4 [shape = 's32[2]{0}', space=sflag, size = 0x8, scoped, tag = 'scoped memory for tpu_custom_call.1']
    #allocation5 [shape = 's32[2]{0}', space=sflag, size = 0x8, scoped, tag = 'scoped memory for tpu_custom_call.1']
    #allocation6 [shape = 'u8[4096]{0}', space=vmem, size = 0x1000, scoped, tag = 'input window, operand 1, single buffered']
    #allocation7 [shape = 's32[1]{0}', space=sflag, size = 0x4, scoped, tag = 'scoped memory for tpu_custom_call.1']
    #allocation8 [shape = 'u8[2048]{0}', space=vmem, size = 0x800, scoped, tag = 'input window, operand 2, single buffered']
    #allocation9 [shape = 'u8[131072]{0}', space=vmem, size = 0x20000, scoped, tag = 'input window, operand 4, single buffered']
    #allocation10 [shape = 's32[1]{0}', space=sflag, size = 0x4, scoped, tag = 'scoped memory for tpu_custom_call.1']
    #allocation11 [shape = 'u8[16384]{0}', space=vmem, size = 0x4000, scoped, tag = 'input window, operand 5, single buffered']
    #allocation12 [shape = 'u8[8192]{0}', space=vmem, size = 0x2000, scoped, tag = 'output window, operand 0']
    %11 = vsyncpa [#allocation4], 0
    %12 = vsyncpa [#allocation7], 0
    %13 = vsyncpa [#allocation10], 0
    %14 = vsyncpa [#allocation5], 0
    %s15 = scalar_lea.sflag [#allocation5], 1
    %16 = vsyncpa %s15, 0
    loop: start=0, step=1, limit=5
    $region2: #{tpu_custom_call.1} parent=1 // loop_pre_header
      _
    $region3: #{tpu_custom_call.1} parent=1 // loop_header
      %s18 = sphi 0, %s22
      %p19 = scmp.ge.s32.totalorder %s18, 5
      %s25 = sphi 0, %s37
      %s26 = sphi 0, %s33
      %s27 = sphi 0, %s25
      %s28 = sphi 0, %s26
      %s29 = sphi 0, %s27
      %s30 = sphi 0, %s28
      %s40 = sphi 0, %s42
      %s43 = sphi 0, %s40
      %s44 = sphi 0, %s43
      %s60 = sphi 0, %s44
      %s66 = sphi 0, %s68
      %s69 = sphi 0, %s66
      %s70 = sphi 0, %s69
      %s86 = sphi 0, %s70
      %s90 = sphi 0, %s90
      %s92 = sphi 0, %s90
      %s93 = sphi 0, %s92
      %s107 = sphi 0, %s93
      %s111 = sphi 0, %s111
      %s113 = sphi 0, %s111
      %s114 = sphi 0, %s113
      %s128 = sphi 0, %s114
      %s132 = sphi 0, %s132
      %s134 = sphi 0, %s132
      %s135 = sphi 0, %s134
      %s149 = sphi 0, %s135
      %s155 = sphi 0, %s157
      %s158 = sphi 0, %s155
      %s159 = sphi 0, %s158
      %s175 = sphi 0, %s159
      %s183 = sphi 0, %s185
      %s186 = sphi 0, %s183
      %s187 = sphi 0, %s186
      %s203 = sphi 0, %s187
    $region4: #{tpu_custom_call.1} parent=1 // loop_header_branch
      %21 = sbr.rel (%p19) target = $region8
    $region5: #{tpu_custom_call.1} parent=1 // loop_body
      %s23 = ssub.s32 %s18, 1
      %s24 = ssub.s32 %s18, 2
      %s31 = sadd.s32 1, %s26
      %p32 = scmp.ge.s32.totalorder %s31, 3
      %s33 = scalar_select %p32, 0, %s31
      %s34 = sadd.s32 1, %s25
      %s35 = scalar_select %p32, %s34, %s25
      %p36 = scmp.ge.s32.totalorder %s35, 1
      %s37 = scalar_select %p36, 0, %s35
      %s38 = ssub.s32 %s25, %s37
      %p39 = scmp.eq.s32.totalorder %s38, 0
      %s41 = sadd.s32 %s40, 1
      %s42 = scalar_select %p39, %s40, %s41
      %p45 = pneg %p39
      %p46 = scmp.eq.s32.totalorder %s18, 2
      %p47 = por %p45, %p46
      %p48 = scmp.ne.s32.totalorder %s40, %s43
      %p49 = scmp.eq.s32.totalorder %s18, 0
      %p50 = por %p48, %p49
      %p51 = scmp.ne.s32.totalorder %s40, %s43
      %p52 = scmp.eq.s32.totalorder %s23, 2
      %p53 = por %p51, %p52
      %p54 = scmp.ne.s32.totalorder %s43, %s44
      %p55 = scmp.eq.s32.totalorder %s23, 0
      %p56 = por %p54, %p55
      %p57 = scmp.ne.s32.totalorder %s43, %s44
      %p58 = scmp.eq.s32.totalorder %s24, 2
      %p59 = por %p57, %p58
      %p61 = scmp.ne.s32.totalorder %s44, %s60
      %p62 = scmp.eq.s32.totalorder %s24, 0
      %p63 = por %p61, %p62
      %s64 = ssub.s32 %s25, %s37
      %p65 = scmp.eq.s32.totalorder %s64, 0
      %s67 = sadd.s32 %s66, 1
      %s68 = scalar_select %p65, %s66, %s67
      %p71 = pneg %p65
      %p72 = scmp.eq.s32.totalorder %s18, 2
      %p73 = por %p71, %p72
      %p74 = scmp.ne.s32.totalorder %s66, %s69
      %p75 = scmp.eq.s32.totalorder %s18, 0
      %p76 = por %p74, %p75
      %p77 = scmp.ne.s32.totalorder %s66, %s69
      %p78 = scmp.eq.s32.totalorder %s23, 2
      %p79 = por %p77, %p78
      %p80 = scmp.ne.s32.totalorder %s69, %s70
      %p81 = scmp.eq.s32.totalorder %s23, 0
      %p82 = por %p80, %p81
      %p83 = scmp.ne.s32.totalorder %s69, %s70
      %p84 = scmp.eq.s32.totalorder %s24, 2
      %p85 = por %p83, %p84
      %p87 = scmp.ne.s32.totalorder %s70, %s86
      %p88 = scmp.eq.s32.totalorder %s24, 0
      %p89 = por %p87, %p88
      %s91 = sadd.s32 %s90, 1
      %p94 = scmp.eq.s32.totalorder %s18, 2
      %p95 = scmp.ne.s32.totalorder %s90, %s92
      %p96 = scmp.eq.s32.totalorder %s18, 0
      %p97 = por %p95, %p96
      %p98 = scmp.ne.s32.totalorder %s90, %s92
      %p99 = scmp.eq.s32.totalorder %s23, 2
      %p100 = por %p98, %p99
      %p101 = scmp.ne.s32.totalorder %s92, %s93
      %p102 = scmp.eq.s32.totalorder %s23, 0
      %p103 = por %p101, %p102
      %p104 = scmp.ne.s32.totalorder %s92, %s93
      %p105 = scmp.eq.s32.totalorder %s24, 2
      %p106 = por %p104, %p105
      %p108 = scmp.ne.s32.totalorder %s93, %s107
      %p109 = scmp.eq.s32.totalorder %s24, 0
      %p110 = por %p108, %p109
      %s112 = sadd.s32 %s111, 1
      %p115 = scmp.eq.s32.totalorder %s18, 2
      %p116 = scmp.ne.s32.totalorder %s111, %s113
      %p117 = scmp.eq.s32.totalorder %s18, 0
      %p118 = por %p116, %p117
      %p119 = scmp.ne.s32.totalorder %s111, %s113
      %p120 = scmp.eq.s32.totalorder %s23, 2
      %p121 = por %p119, %p120
      %p122 = scmp.ne.s32.totalorder %s113, %s114
      %p123 = scmp.eq.s32.totalorder %s23, 0
      %p124 = por %p122, %p123
      %p125 = scmp.ne.s32.totalorder %s113, %s114
      %p126 = scmp.eq.s32.totalorder %s24, 2
      %p127 = por %p125, %p126
      %p129 = scmp.ne.s32.totalorder %s114, %s128
      %p130 = scmp.eq.s32.totalorder %s24, 0
      %p131 = por %p129, %p130
      %s133 = sadd.s32 %s132, 1
      %p136 = scmp.eq.s32.totalorder %s18, 2
      %p137 = scmp.ne.s32.totalorder %s132, %s134
      %p138 = scmp.eq.s32.totalorder %s18, 0
      %p139 = por %p137, %p138
      %p140 = scmp.ne.s32.totalorder %s132, %s134
      %p141 = scmp.eq.s32.totalorder %s23, 2
      %p142 = por %p140, %p141
      %p143 = scmp.ne.s32.totalorder %s134, %s135
      %p144 = scmp.eq.s32.totalorder %s23, 0
      %p145 = por %p143, %p144
      %p146 = scmp.ne.s32.totalorder %s134, %s135
      %p147 = scmp.eq.s32.totalorder %s24, 2
      %p148 = por %p146, %p147
      %p150 = scmp.ne.s32.totalorder %s135, %s149
      %p151 = scmp.eq.s32.totalorder %s24, 0
      %p152 = por %p150, %p151
      %s153 = ssub.s32 %s25, %s37
      %p154 = scmp.eq.s32.totalorder %s153, 0
      %s156 = sadd.s32 %s155, 1
      %s157 = scalar_select %p154, %s155, %s156
      %p160 = pneg %p154
      %p161 = scmp.eq.s32.totalorder %s18, 2
      %p162 = por %p160, %p161
      %p163 = scmp.ne.s32.totalorder %s155, %s158
      %p164 = scmp.eq.s32.totalorder %s18, 0
      %p165 = por %p163, %p164
      %p166 = scmp.ne.s32.totalorder %s155, %s158
      %p167 = scmp.eq.s32.totalorder %s23, 2
      %p168 = por %p166, %p167
      %p169 = scmp.ne.s32.totalorder %s158, %s159
      %p170 = scmp.eq.s32.totalorder %s23, 0
      %p171 = por %p169, %p170
      %p172 = scmp.ne.s32.totalorder %s158, %s159
      %p173 = scmp.eq.s32.totalorder %s24, 2
      %p174 = por %p172, %p173
      %p176 = scmp.ne.s32.totalorder %s159, %s175
      %p177 = scmp.eq.s32.totalorder %s24, 0
      %p178 = por %p176, %p177
      %s179 = ssub.s32 %s25, %s37
      %s180 = ssub.s32 %s26, %s33
      %s181 = sor.u32 %s179, %s180
      %p182 = scmp.eq.s32.totalorder %s181, 0
      %s184 = sadd.s32 %s183, 1
      %s185 = scalar_select %p182, %s183, %s184
      %p188 = pneg %p182
      %p189 = scmp.eq.s32.totalorder %s18, 2
      %p190 = por %p188, %p189
      %p191 = scmp.ne.s32.totalorder %s183, %s186
      %p192 = scmp.eq.s32.totalorder %s18, 0
      %p193 = por %p191, %p192
      %p194 = scmp.ne.s32.totalorder %s183, %s186
      %p195 = scmp.eq.s32.totalorder %s23, 2
      %p196 = por %p194, %p195
      %p197 = scmp.ne.s32.totalorder %s186, %s187
      %p198 = scmp.eq.s32.totalorder %s23, 0
      %p199 = por %p197, %p198
      %p200 = scmp.ne.s32.totalorder %s186, %s187
      %p201 = scmp.eq.s32.totalorder %s24, 2
      %p202 = por %p200, %p201
      %p204 = scmp.ne.s32.totalorder %s187, %s203
      %p205 = scmp.eq.s32.totalorder %s24, 0
      %p206 = por %p204, %p205
      %p207 = scmp.le.s32.totalorder 1, %s18
      %p208 = scmp.lt.s32.totalorder %s18, 4
      %p209 = pnand %p207, %p208
      %p210 = pneg %p209
      // Predicated region
      $region9: #{tpu_custom_call.1} parent=5 // pred_check
        _
      $region10: #{tpu_custom_call.1} parent=5 // pred_check_branch
        %212 = sbr.rel (%p209) target = $region12
      $region11: #{tpu_custom_call.1} parent=5 // pred_region
        %s213 = ssub.s32 %s18, 1
        // Predicated region
        $region13: #{tpu_custom_call.1} parent=11 // pred_check
          %p214 = pneg %p56
        $region14: #{tpu_custom_call.1} parent=11 // pred_check_branch
          %216 = sbr.rel (%p214) target = $region16
        $region15: #{tpu_custom_call.1} parent=11 // pred_region
          %s218 = ssub.s32 128, 128
          %219 = vsyncadd [#allocation4], %s218
          %s220 = smul.addr %s27, 128
          %s221 = scalar_lea.hbm %s0, %s220
          %s223 = sshll.u32 [#allocation3], 4
          %s224 = int_to_ptr.vmem [resolvable:$true] %s223
          %226 = dma.hbm_to_vmem [thread:$0]  %s221, 128, %s224, [#allocation4]
        $region16: #{tpu_custom_call.1} parent=11 // pred_fallthru
          _
        // Predicated region
        $region17: #{tpu_custom_call.1} parent=11 // pred_check
          %p227 = pneg %p82
        $region18: #{tpu_custom_call.1} parent=11 // pred_check_branch
          %229 = sbr.rel (%p227) target = $region20
        $region19: #{tpu_custom_call.1} parent=11 // pred_region
          %s231 = ssub.s32 128, 128
          %232 = vsyncadd [#allocation7], %s231
          %s233 = smul.addr %s27, 128
          %s234 = scalar_lea.hbm %s1, %s233
          %s236 = sshll.u32 [#allocation6], 4
          %s237 = int_to_ptr.vmem [resolvable:$true] %s236
          %239 = dma.hbm_to_vmem [thread:$0]  %s234, 128, %s237, [#allocation7]
        $region20: #{tpu_custom_call.1} parent=11 // pred_fallthru
          _
        // Predicated region
        $region21: #{tpu_custom_call.1} parent=11 // pred_check
          %p240 = pneg %p103
        $region22: #{tpu_custom_call.1} parent=11 // pred_check_branch
          %242 = sbr.rel (%p240) target = $region24
        $region23: #{tpu_custom_call.1} parent=11 // pred_region
          %s244 = ssub.s32 64, 64
          %245 = vsyncadd [#allocation7], %s244
          %s247 = sshll.u32 [#allocation8], 4
          %s248 = int_to_ptr.vmem [resolvable:$true] %s247
          %250 = dma.hbm_to_vmem [thread:$0]  %s2, 64, %s248, [#allocation7]
        $region24: #{tpu_custom_call.1} parent=11 // pred_fallthru
          _
        // Predicated region
        $region25: #{tpu_custom_call.1} parent=11 // pred_check
          %p251 = pneg %p124
        $region26: #{tpu_custom_call.1} parent=11 // pred_check_branch
          %253 = sbr.rel (%p251) target = $region28
        $region27: #{tpu_custom_call.1} parent=11 // pred_region
          _
        $region28: #{tpu_custom_call.1} parent=11 // pred_fallthru
          _
        // Predicated region
        $region29: #{tpu_custom_call.1} parent=11 // pred_check
          %p254 = pneg %p145
        $region30: #{tpu_custom_call.1} parent=11 // pred_check_branch
          %256 = sbr.rel (%p254) target = $region32
        $region31: #{tpu_custom_call.1} parent=11 // pred_region
          %s258 = ssub.s32 4096, 4096
          %259 = vsyncadd [#allocation10], %s258
          %s260 = sshll.u32 [#allocation9], 4
          %s261 = int_to_ptr.vmem [resolvable:$true] %s260
          %266 = dma.hbm_to_vmem [thread:$0]  %s4, 4096, %s261, [#allocation10], 128, 128, 8
        $region32: #{tpu_custom_call.1} parent=11 // pred_fallthru
          _
        // Predicated region
        $region33: #{tpu_custom_call.1} parent=11 // pred_check
          %p267 = pneg %p171
        $region34: #{tpu_custom_call.1} parent=11 // pred_check_branch
          %269 = sbr.rel (%p267) target = $region36
        $region35: #{tpu_custom_call.1} parent=11 // pred_region
          %s271 = ssub.s32 512, 512
          %272 = vsyncadd [#allocation10], %s271
          %s273 = smul.addr %s27, 4
          %s274 = smul.addr %s273, 128
          %s275 = scalar_lea.hbm %s5, %s274
          %s277 = sshll.u32 [#allocation11], 4
          %s278 = int_to_ptr.vmem [resolvable:$true] %s277
          %280 = dma.hbm_to_vmem [thread:$0]  %s275, 512, %s278, [#allocation10]
        $region36: #{tpu_custom_call.1} parent=11 // pred_fallthru
          _
      $region12: #{tpu_custom_call.1} parent=5 // pred_fallthru
        _
      %p281 = scmp.lt.s32.totalorder %s18, 3
      // Predicated region
      $region37: #{tpu_custom_call.1} parent=5 // pred_check
        %p282 = pneg %p281
      $region38: #{tpu_custom_call.1} parent=5 // pred_check_branch
        %284 = sbr.rel (%p282) target = $region40
      $region39: #{tpu_custom_call.1} parent=5 // pred_region
        _
      $region40: #{tpu_custom_call.1} parent=5 // pred_fallthru
        _
      %p285 = scmp.le.s32.totalorder 1, %s18
      %p286 = scmp.lt.s32.totalorder %s18, 4
      %p287 = pnand %p285, %p286
      %p288 = pneg %p287
      // Predicated region
      $region41: #{tpu_custom_call.1} parent=5 // pred_check
        _
      $region42: #{tpu_custom_call.1} parent=5 // pred_check_branch
        %290 = sbr.rel (%p287) target = $region44
      $region43: #{tpu_custom_call.1} parent=5 // pred_region
        %s291 = ssub.s32 %s18, 1
        // Predicated region
        $region45: #{tpu_custom_call.1} parent=43 // pred_check
          %p292 = pneg %p56
        $region46: #{tpu_custom_call.1} parent=43 // pred_check_branch
          %294 = sbr.rel (%p292) target = $region48
        $region47: #{tpu_custom_call.1} parent=43 // pred_region
          %295 = dma.done [#allocation4], 128
        $region48: #{tpu_custom_call.1} parent=43 // pred_fallthru
          _
        // Predicated region
        $region49: #{tpu_custom_call.1} parent=43 // pred_check
          %p296 = pneg %p82
        $region50: #{tpu_custom_call.1} parent=43 // pred_check_branch
          %298 = sbr.rel (%p296) target = $region52
        $region51: #{tpu_custom_call.1} parent=43 // pred_region
          %299 = dma.done [#allocation7], 128
        $region52: #{tpu_custom_call.1} parent=43 // pred_fallthru
          _
        // Predicated region
        $region53: #{tpu_custom_call.1} parent=43 // pred_check
          %p300 = pneg %p103
        $region54: #{tpu_custom_call.1} parent=43 // pred_check_branch
          %302 = sbr.rel (%p300) target = $region56
        $region55: #{tpu_custom_call.1} parent=43 // pred_region
          %303 = dma.done [#allocation7], 64
        $region56: #{tpu_custom_call.1} parent=43 // pred_fallthru
          _
        // Predicated region
        $region57: #{tpu_custom_call.1} parent=43 // pred_check
          %p304 = pneg %p145
        $region58: #{tpu_custom_call.1} parent=43 // pred_check_branch
          %306 = sbr.rel (%p304) target = $region60
        $region59: #{tpu_custom_call.1} parent=43 // pred_region
          %307 = dma.done [#allocation10], 4096
        $region60: #{tpu_custom_call.1} parent=43 // pred_fallthru
          _
        // Predicated region
        $region61: #{tpu_custom_call.1} parent=43 // pred_check
          %p308 = pneg %p171
        $region62: #{tpu_custom_call.1} parent=43 // pred_check_branch
          %310 = sbr.rel (%p308) target = $region64
        $region63: #{tpu_custom_call.1} parent=43 // pred_region
          %311 = dma.done [#allocation10], 512
        $region64: #{tpu_custom_call.1} parent=43 // pred_fallthru
          _
        %p312 = pneg %p56
        %p313 = pneg %p53
        %p314 = pneg %p82
        %p315 = pneg %p79
        %p316 = pneg %p103
        %p317 = pneg %p100
        %p318 = pneg %p124
        %p319 = pneg %p121
        %p320 = pneg %p145
        %p321 = pneg %p142
        %p322 = pneg %p171
        %p323 = pneg %p168
        %p324 = pneg %p199
        %p325 = pneg %p196
        %s326 = sand.u32 %s186, 1
        %s327 = scalar_lea.sflag [#allocation5], %s326
        %s328 = sand.u32 %s186, 1
        %s329 = smul.addr %s328, 8
        %s330 = scalar_lea.vmem [#allocation12], %s329
        %p331 = scmp.eq.s32.totalorder %s28, 0
        // Predicated region
        $region65: #{tpu_custom_call.1} parent=43 // pred_check
          %p332 = pneg %p331
        $region66: #{tpu_custom_call.1} parent=43 // pred_check_branch
          %334 = sbr.rel (%p332) target = $region68
        $region67: #{tpu_custom_call.1} parent=43 // pred_region
          %v335 = vld [vmem:[#allocation8] sm:$0x7]
          %v336 = vld [vmem:[%s3] sm:$0x7]
          %v337 = vld [vmem:[#allocation3] sm:$0xff]
          %v338 = vld [vmem:[#allocation6] sm:$0xff]
          %v339 = vlaneseq
          %v340 = vand.u32 %v339, 127
          %vm341 = vcmp.ge.s32.totalorder %v340, 33
          %v342 = vsel %vm341, 1, 0
          %v343 = vcvt.s32.f32 %v342
          %345 = vset.pattern.permute.xlu0 0
          %346 = vperm.xlu0 %345, %v337
          %v347 = vpop.permute.xlu0 %346
          %v349 = vlaneseq
          %v350 = vshrl.u32 %v349, 7
          %v351 = vsub.s32 0, %v350
          %v352 = vrot.slane %v335, %v351
          %v353 = vmul.f32 %v347, %v352
          %354 = vset.pattern.permute.xlu0 1
          %355 = vperm.xlu0 %354, %v337
          %v356 = vpop.permute.xlu0 %355
          %v358 = vlaneseq
          %v359 = vshrl.u32 %v358, 7
          %v360 = vsub.s32 1, %v359
          %v361 = vrot.slane %v335, %v360
          %v362 = vmul.f32 %v356, %v361
          %v363 = vadd.f32 %v353, %v362
          %364 = vset.pattern.permute.xlu0 2
          %365 = vperm.xlu0 %364, %v337
          %v366 = vpop.permute.xlu0 %365
          %v368 = vlaneseq
          %v369 = vshrl.u32 %v368, 7
          %v370 = vsub.s32 2, %v369
          %v371 = vrot.slane %v335, %v370
          %v372 = vmul.f32 %v366, %v371
          %v373 = vadd.f32 %v363, %v372
          %v374 = vlaneseq
          %v375 = vshrl.u32 %v374, 7
          %v376 = vsub.s32 0, %v375
          %v377 = vrot.slane %v336, %v376
          %v378 = vmul.f32 %v347, %v377
          %v379 = vlaneseq
          %v380 = vshrl.u32 %v379, 7
          %v381 = vsub.s32 1, %v380
          %v382 = vrot.slane %v336, %v381
          %v383 = vmul.f32 %v356, %v382
          %v384 = vadd.f32 %v378, %v383
          %v385 = vlaneseq
          %v386 = vshrl.u32 %v385, 7
          %v387 = vsub.s32 2, %v386
          %v388 = vrot.slane %v336, %v387
          %v389 = vmul.f32 %v366, %v388
          %v390 = vadd.f32 %v384, %v389
          %392 = vset.pattern.permute.xlu0 0
          %393 = vperm.xlu0 %392, %v338
          %v394 = vpop.permute.xlu0 %393
          %v396 = vmul.f32 %v394, %v352
          %397 = vset.pattern.permute.xlu0 1
          %398 = vperm.xlu0 %397, %v338
          %v399 = vpop.permute.xlu0 %398
          %v401 = vmul.f32 %v399, %v361
          %v402 = vadd.f32 %v396, %v401
          %403 = vset.pattern.permute.xlu0 2
          %404 = vperm.xlu0 %403, %v338
          %v405 = vpop.permute.xlu0 %404
          %v407 = vmul.f32 %v405, %v371
          %v408 = vadd.f32 %v402, %v407
          %v409 = vadd.f32 %v408, %v343
          %v410 = vmul.f32 %v394, %v377
          %v411 = vmul.f32 %v399, %v382
          %v412 = vadd.f32 %v410, %v411
          %v413 = vmul.f32 %v405, %v388
          %v414 = vadd.f32 %v412, %v413
          %v415 = vmul.f32 %v409, %v409
          %v416 = vmul.f32 %v414, %v414
          %v417 = vadd.f32 %v415, %v416
          %v418 = vrcp.pop %v417
          %v419 = vmul.f32 1.0, %v418
          %v420 = vmul.f32 %v373, %v409
          %v421 = vmul.f32 %v390, %v414
          %v422 = vadd.f32 %v420, %v421
          %v423 = vmul.f32 %v422, %v419
          %v424 = vmul.f32 %v390, %v409
          %v425 = vmul.f32 %v373, %v414
          %v426 = vsub.f32 %v424, %v425
          %v427 = vmul.f32 %v426, %v419
          %428 = vset.pattern.permute.xlu0 3
          %429 = vperm.xlu0 %428, %v337
          %v430 = vpop.permute.xlu0 %429
          %v432 = vmul.f32 %v430, %v352
          %433 = vset.pattern.permute.xlu0 4
          %434 = vperm.xlu0 %433, %v337
          %v435 = vpop.permute.xlu0 %434
          %v437 = vmul.f32 %v435, %v361
          %v438 = vadd.f32 %v432, %v437
          %439 = vset.pattern.permute.xlu0 5
          %440 = vperm.xlu0 %439, %v337
          %v441 = vpop.permute.xlu0 %440
          %v443 = vmul.f32 %v441, %v371
          %v444 = vadd.f32 %v438, %v443
          %v445 = vmul.f32 %v430, %v377
          %v446 = vmul.f32 %v435, %v382
          %v447 = vadd.f32 %v445, %v446
          %v448 = vmul.f32 %v441, %v388
          %v449 = vadd.f32 %v447, %v448
          %450 = vset.pattern.permute.xlu0 3
          %451 = vperm.xlu0 %450, %v338
          %v452 = vpop.permute.xlu0 %451
          %v454 = vmul.f32 %v452, %v352
          %455 = vset.pattern.permute.xlu0 4
          %456 = vperm.xlu0 %455, %v338
          %v457 = vpop.permute.xlu0 %456
          %v459 = vmul.f32 %v457, %v361
          %v460 = vadd.f32 %v454, %v459
          %461 = vset.pattern.permute.xlu0 5
          %462 = vperm.xlu0 %461, %v338
          %v463 = vpop.permute.xlu0 %462
          %v465 = vmul.f32 %v463, %v371
          %v466 = vadd.f32 %v460, %v465
          %v467 = vadd.f32 %v466, %v343
          %v468 = vmul.f32 %v452, %v377
          %v469 = vmul.f32 %v457, %v382
          %v470 = vadd.f32 %v468, %v469
          %v471 = vmul.f32 %v463, %v388
          %v472 = vadd.f32 %v470, %v471
          %v473 = vmul.f32 %v467, %v467
          %v474 = vmul.f32 %v472, %v472
          %v475 = vadd.f32 %v473, %v474
          %v476 = vrcp.pop %v475
          %v477 = vmul.f32 1.0, %v476
          %v478 = vmul.f32 %v444, %v467
          %v479 = vmul.f32 %v449, %v472
          %v480 = vadd.f32 %v478, %v479
          %v481 = vmul.f32 %v480, %v477
          %v482 = vmul.f32 %v449, %v467
          %v483 = vmul.f32 %v444, %v472
          %v484 = vsub.f32 %v482, %v483
          %v485 = vmul.f32 %v484, %v477
          %v486 = vmul.f32 %v423, %v481
          %v487 = vmul.f32 %v427, %v485
          %v488 = vsub.f32 %v486, %v487
          %v489 = vmul.f32 %v423, %v485
          %v490 = vmul.f32 %v427, %v481
          %v491 = vadd.f32 %v489, %v490
          %v492 = vld [vmem:[#allocation9] sm:$0xff]
          %v493 = vld [vmem:[#allocation9 + $0x8] sm:$0xff]
          %v494 = vld [vmem:[#allocation9 + $0x10] sm:$0xff]
          %v495 = vld [vmem:[#allocation9 + $0x18] sm:$0xff]
          %v496 = vld [vmem:[#allocation9 + $0x20] sm:$0xff]
          %v497 = vld [vmem:[#allocation9 + $0x28] sm:$0xff]
          %v498 = vld [vmem:[#allocation9 + $0x30] sm:$0xff]
          %v499 = vld [vmem:[#allocation9 + $0x38] sm:$0xff]
          %v500 = vld [vmem:[#allocation9 + $0x40] sm:$0xff]
          %v501 = vld [vmem:[#allocation9 + $0x48] sm:$0xff]
          %v502 = vld [vmem:[#allocation9 + $0x50] sm:$0xff]
          %v503 = vld [vmem:[#allocation9 + $0x58] sm:$0xff]
          %v504 = vld [vmem:[#allocation9 + $0x60] sm:$0xff]
          %v505 = vld [vmem:[#allocation9 + $0x68] sm:$0xff]
          %v506 = vld [vmem:[#allocation9 + $0x70] sm:$0xff]
          %v507 = vld [vmem:[#allocation9 + $0x78] sm:$0xff]
          %v508 = vld [vmem:[#allocation9 + $0x80] sm:$0xff]
          %v509 = vld [vmem:[#allocation9 + $0x88] sm:$0xff]
          %v510 = vld [vmem:[#allocation9 + $0x90] sm:$0xff]
          %v511 = vld [vmem:[#allocation9 + $0x98] sm:$0xff]
          %v512 = vld [vmem:[#allocation9 + $0xa0] sm:$0xff]
          %v513 = vld [vmem:[#allocation9 + $0xa8] sm:$0xff]
          %v514 = vld [vmem:[#allocation9 + $0xb0] sm:$0xff]
          %v515 = vld [vmem:[#allocation9 + $0xb8] sm:$0xff]
          %v516 = vld [vmem:[#allocation9 + $0xc0] sm:$0xff]
          %v517 = vld [vmem:[#allocation9 + $0xc8] sm:$0xff]
          %v518 = vld [vmem:[#allocation9 + $0xd0] sm:$0xff]
          %v519 = vld [vmem:[#allocation9 + $0xd8] sm:$0xff]
          %v520 = vld [vmem:[#allocation9 + $0xe0] sm:$0xff]
          %v521 = vld [vmem:[#allocation9 + $0xe8] sm:$0xff]
          %v522 = vld [vmem:[#allocation9 + $0xf0] sm:$0xff]
          %v523 = vld [vmem:[#allocation9 + $0xf8] sm:$0xff]
          %524 = vmatprep.subr.mxu0 0.0
          %v525 = vand.u32 %v507, 4294901760
          %526 = vmatpush1.msra.mxu0 %v525
          %527 = vmatprep.subr.mxu0 0.0
          %v528 = vand.u32 %v506, 4294901760
          %529 = vmatpush1.msra.mxu0 %v528
          %530 = vmatprep.subr.mxu0 0.0
          %v531 = vand.u32 %v505, 4294901760
          %532 = vmatpush1.msra.mxu0 %v531
          %533 = vmatprep.subr.mxu0 0.0
          %v534 = vand.u32 %v504, 4294901760
          %535 = vmatpush1.msra.mxu0 %v534
          %536 = vmatprep.subr.mxu0 0.0
          %v537 = vand.u32 %v503, 4294901760
          %538 = vmatpush1.msra.mxu0 %v537
          %539 = vmatprep.subr.mxu0 0.0
          %v540 = vand.u32 %v502, 4294901760
          %541 = vmatpush1.msra.mxu0 %v540
          %542 = vmatprep.subr.mxu0 0.0
          %v543 = vand.u32 %v501, 4294901760
          %544 = vmatpush1.msra.mxu0 %v543
          %545 = vmatprep.subr.mxu0 0.0
          %v546 = vand.u32 %v500, 4294901760
          %547 = vmatpush1.msra.mxu0 %v546
          %548 = vmatprep.subr.mxu0 0.0
          %v549 = vand.u32 %v499, 4294901760
          %550 = vmatpush1.msra.mxu0 %v549
          %551 = vmatprep.subr.mxu0 0.0
          %v552 = vand.u32 %v498, 4294901760
          %553 = vmatpush1.msra.mxu0 %v552
          %554 = vmatprep.subr.mxu0 0.0
          %v555 = vand.u32 %v497, 4294901760
          %556 = vmatpush1.msra.mxu0 %v555
          %557 = vmatprep.subr.mxu0 0.0
          %v558 = vand.u32 %v496, 4294901760
          %559 = vmatpush1.msra.mxu0 %v558
          %560 = vmatprep.subr.mxu0 0.0
          %v561 = vand.u32 %v495, 4294901760
          %562 = vmatpush1.msra.mxu0 %v561
          %563 = vmatprep.subr.mxu0 0.0
          %v564 = vand.u32 %v494, 4294901760
          %565 = vmatpush1.msra.mxu0 %v564
          %566 = vmatprep.subr.mxu0 0.0
          %v567 = vand.u32 %v493, 4294901760
          %568 = vmatpush1.msra.mxu0 %v567
          %569 = vmatprep.subr.mxu0 0.0
          %v570 = vand.u32 %v492, 4294901760
          %571 = vmatpush1.msra.mxu0 %v570
          %572 = vmatprep.subr.mxu0 0.0
          %v573 = vand.u32 %v523, 4294901760
          %574 = vmatpush2.msra.mxu0 %v573
          %575 = vmatprep.subr.mxu0 0.0
          %v576 = vand.u32 %v522, 4294901760
          %577 = vmatpush2.msra.mxu0 %v576
          %578 = vmatprep.subr.mxu0 0.0
          %v579 = vand.u32 %v521, 4294901760
          %580 = vmatpush2.msra.mxu0 %v579
          %581 = vmatprep.subr.mxu0 0.0
          %v582 = vand.u32 %v520, 4294901760
          %583 = vmatpush2.msra.mxu0 %v582
          %584 = vmatprep.subr.mxu0 0.0
          %v585 = vand.u32 %v519, 4294901760
          %586 = vmatpush2.msra.mxu0 %v585
          %587 = vmatprep.subr.mxu0 0.0
          %v588 = vand.u32 %v518, 4294901760
          %589 = vmatpush2.msra.mxu0 %v588
          %590 = vmatprep.subr.mxu0 0.0
          %v591 = vand.u32 %v517, 4294901760
          %592 = vmatpush2.msra.mxu0 %v591
          %593 = vmatprep.subr.mxu0 0.0
          %v594 = vand.u32 %v516, 4294901760
          %595 = vmatpush2.msra.mxu0 %v594
          %596 = vmatprep.subr.mxu0 0.0
          %v597 = vand.u32 %v515, 4294901760
          %598 = vmatpush2.msra.mxu0 %v597
          %599 = vmatprep.subr.mxu0 0.0
          %v600 = vand.u32 %v514, 4294901760
          %601 = vmatpush2.msra.mxu0 %v600
          %602 = vmatprep.subr.mxu0 0.0
          %v603 = vand.u32 %v513, 4294901760
          %604 = vmatpush2.msra.mxu0 %v603
          %605 = vmatprep.subr.mxu0 0.0
          %v606 = vand.u32 %v512, 4294901760
          %607 = vmatpush2.msra.mxu0 %v606
          %608 = vmatprep.subr.mxu0 0.0
          %v609 = vand.u32 %v511, 4294901760
          %610 = vmatpush2.msra.mxu0 %v609
          %611 = vmatprep.subr.mxu0 0.0
          %v612 = vand.u32 %v510, 4294901760
          %613 = vmatpush2.msra.mxu0 %v612
          %614 = vmatprep.subr.mxu0 0.0
          %v615 = vand.u32 %v509, 4294901760
          %616 = vmatpush2.msra.mxu0 %v615
          %617 = vmatprep.subr.mxu0 0.0
          %v618 = vand.u32 %v508, 4294901760
          %619 = vmatpush2.msra.mxu0 %v618
          %v620 = vand.u32 %v491, 4294901760
          %v621 = vsub.f32 %v491, %v620
          %v622 = vand.u32 %v621, 4294901760
          %v623 = vsub.f32 %v621, %v622
          %v624 = vand.u32 %v623, 4294901760
          %625 = vmatprep.mubr.f32.mxu0 %v624
          %v626 = vand.u32 %v488, 4294901760
          %v627 = vsub.f32 %v488, %v626
          %v628 = vand.u32 %v627, 4294901760
          %v629 = vsub.f32 %v627, %v628
          %v630 = vand.u32 %v629, 4294901760
          %631 = vmatmul.mubr.f32.gmra.mxu0 %v630
          %v632 = vpop.f32.mrf.mxu0
          %v633 = vadd.f32 0.0, %v632
          %v634 = vpop.f32.mrf.mxu0
          %635 = vdwg.mxu0
          %636 = vmatprep.subr.mxu0 0.0
          %v637 = vand.u32 %v507, 4294901760
          %v638 = vsub.f32 %v507, %v637
          %v639 = vand.u32 %v638, 4294901760
          %v640 = vsub.f32 %v638, %v639
          %v641 = vand.u32 %v640, 4294901760
          %642 = vmatpush1.msra.mxu0 %v641
          %643 = vmatprep.subr.mxu0 0.0
          %v644 = vand.u32 %v506, 4294901760
          %v645 = vsub.f32 %v506, %v644
          %v646 = vand.u32 %v645, 4294901760
          %v647 = vsub.f32 %v645, %v646
          %v648 = vand.u32 %v647, 4294901760
          %649 = vmatpush1.msra.mxu0 %v648
          %650 = vmatprep.subr.mxu0 0.0
          %v651 = vand.u32 %v505, 4294901760
          %v652 = vsub.f32 %v505, %v651
          %v653 = vand.u32 %v652, 4294901760
          %v654 = vsub.f32 %v652, %v653
          %v655 = vand.u32 %v654, 4294901760
          %656 = vmatpush1.msra.mxu0 %v655
          %657 = vmatprep.subr.mxu0 0.0
          %v658 = vand.u32 %v504, 4294901760
          %v659 = vsub.f32 %v504, %v658
          %v660 = vand.u32 %v659, 4294901760
          %v661 = vsub.f32 %v659, %v660
          %v662 = vand.u32 %v661, 4294901760
          %663 = vmatpush1.msra.mxu0 %v662
          %664 = vmatprep.subr.mxu0 0.0
          %v665 = vand.u32 %v503, 4294901760
          %v666 = vsub.f32 %v503, %v665
          %v667 = vand.u32 %v666, 4294901760
          %v668 = vsub.f32 %v666, %v667
          %v669 = vand.u32 %v668, 4294901760
          %670 = vmatpush1.msra.mxu0 %v669
          %671 = vmatprep.subr.mxu0 0.0
          %v672 = vand.u32 %v502, 4294901760
          %v673 = vsub.f32 %v502, %v672
          %v674 = vand.u32 %v673, 4294901760
          %v675 = vsub.f32 %v673, %v674
          %v676 = vand.u32 %v675, 4294901760
          %677 = vmatpush1.msra.mxu0 %v676
          %678 = vmatprep.subr.mxu0 0.0
          %v679 = vand.u32 %v501, 4294901760
          %v680 = vsub.f32 %v501, %v679
          %v681 = vand.u32 %v680, 4294901760
          %v682 = vsub.f32 %v680, %v681
          %v683 = vand.u32 %v682, 4294901760
          %684 = vmatpush1.msra.mxu0 %v683
          %685 = vmatprep.subr.mxu0 0.0
          %v686 = vand.u32 %v500, 4294901760
          %v687 = vsub.f32 %v500, %v686
          %v688 = vand.u32 %v687, 4294901760
          %v689 = vsub.f32 %v687, %v688
          %v690 = vand.u32 %v689, 4294901760
          %691 = vmatpush1.msra.mxu0 %v690
          %692 = vmatprep.subr.mxu0 0.0
          %v693 = vand.u32 %v499, 4294901760
          %v694 = vsub.f32 %v499, %v693
          %v695 = vand.u32 %v694, 4294901760
          %v696 = vsub.f32 %v694, %v695
          %v697 = vand.u32 %v696, 4294901760
          %698 = vmatpush1.msra.mxu0 %v697
          %699 = vmatprep.subr.mxu0 0.0
          %v700 = vand.u32 %v498, 4294901760
          %v701 = vsub.f32 %v498, %v700
          %v702 = vand.u32 %v701, 4294901760
          %v703 = vsub.f32 %v701, %v702
          %v704 = vand.u32 %v703, 4294901760
          %705 = vmatpush1.msra.mxu0 %v704
          %706 = vmatprep.subr.mxu0 0.0
          %v707 = vand.u32 %v497, 4294901760
          %v708 = vsub.f32 %v497, %v707
          %v709 = vand.u32 %v708, 4294901760
          %v710 = vsub.f32 %v708, %v709
          %v711 = vand.u32 %v710, 4294901760
          %712 = vmatpush1.msra.mxu0 %v711
          %713 = vmatprep.subr.mxu0 0.0
          %v714 = vand.u32 %v496, 4294901760
          %v715 = vsub.f32 %v496, %v714
          %v716 = vand.u32 %v715, 4294901760
          %v717 = vsub.f32 %v715, %v716
          %v718 = vand.u32 %v717, 4294901760
          %719 = vmatpush1.msra.mxu0 %v718
          %720 = vmatprep.subr.mxu0 0.0
          %v721 = vand.u32 %v495, 4294901760
          %v722 = vsub.f32 %v495, %v721
          %v723 = vand.u32 %v722, 4294901760
          %v724 = vsub.f32 %v722, %v723
          %v725 = vand.u32 %v724, 4294901760
          %726 = vmatpush1.msra.mxu0 %v725
          %727 = vmatprep.subr.mxu0 0.0
          %v728 = vand.u32 %v494, 4294901760
          %v729 = vsub.f32 %v494, %v728
          %v730 = vand.u32 %v729, 4294901760
          %v731 = vsub.f32 %v729, %v730
          %v732 = vand.u32 %v731, 4294901760
          %733 = vmatpush1.msra.mxu0 %v732
          %734 = vmatprep.subr.mxu0 0.0
          %v735 = vand.u32 %v493, 4294901760
          %v736 = vsub.f32 %v493, %v735
          %v737 = vand.u32 %v736, 4294901760
          %v738 = vsub.f32 %v736, %v737
          %v739 = vand.u32 %v738, 4294901760
          %740 = vmatpush1.msra.mxu0 %v739
          %741 = vmatprep.subr.mxu0 0.0
          %v742 = vand.u32 %v492, 4294901760
          %v743 = vsub.f32 %v492, %v742
          %v744 = vand.u32 %v743, 4294901760
          %v745 = vsub.f32 %v743, %v744
          %v746 = vand.u32 %v745, 4294901760
          %747 = vmatpush1.msra.mxu0 %v746
          %748 = vmatprep.subr.mxu0 0.0
          %v749 = vand.u32 %v523, 4294901760
          %v750 = vsub.f32 %v523, %v749
          %v751 = vand.u32 %v750, 4294901760
          %v752 = vsub.f32 %v750, %v751
          %v753 = vand.u32 %v752, 4294901760
          %754 = vmatpush2.msra.mxu0 %v753
          %755 = vmatprep.subr.mxu0 0.0
          %v756 = vand.u32 %v522, 4294901760
          %v757 = vsub.f32 %v522, %v756
          %v758 = vand.u32 %v757, 4294901760
          %v759 = vsub.f32 %v757, %v758
          %v760 = vand.u32 %v759, 4294901760
          %761 = vmatpush2.msra.mxu0 %v760
          %762 = vmatprep.subr.mxu0 0.0
          %v763 = vand.u32 %v521, 4294901760
          %v764 = vsub.f32 %v521, %v763
          %v765 = vand.u32 %v764, 4294901760
          %v766 = vsub.f32 %v764, %v765
          %v767 = vand.u32 %v766, 4294901760
          %768 = vmatpush2.msra.mxu0 %v767
          %769 = vmatprep.subr.mxu0 0.0
          %v770 = vand.u32 %v520, 4294901760
          %v771 = vsub.f32 %v520, %v770
          %v772 = vand.u32 %v771, 4294901760
          %v773 = vsub.f32 %v771, %v772
          %v774 = vand.u32 %v773, 4294901760
          %775 = vmatpush2.msra.mxu0 %v774
          %776 = vmatprep.subr.mxu0 0.0
          %v777 = vand.u32 %v519, 4294901760
          %v778 = vsub.f32 %v519, %v777
          %v779 = vand.u32 %v778, 4294901760
          %v780 = vsub.f32 %v778, %v779
          %v781 = vand.u32 %v780, 4294901760
          %782 = vmatpush2.msra.mxu0 %v781
          %783 = vmatprep.subr.mxu0 0.0
          %v784 = vand.u32 %v518, 4294901760
          %v785 = vsub.f32 %v518, %v784
          %v786 = vand.u32 %v785, 4294901760
          %v787 = vsub.f32 %v785, %v786
          %v788 = vand.u32 %v787, 4294901760
          %789 = vmatpush2.msra.mxu0 %v788
          %790 = vmatprep.subr.mxu0 0.0
          %v791 = vand.u32 %v517, 4294901760
          %v792 = vsub.f32 %v517, %v791
          %v793 = vand.u32 %v792, 4294901760
          %v794 = vsub.f32 %v792, %v793
          %v795 = vand.u32 %v794, 4294901760
          %796 = vmatpush2.msra.mxu0 %v795
          %797 = vmatprep.subr.mxu0 0.0
          %v798 = vand.u32 %v516, 4294901760
          %v799 = vsub.f32 %v516, %v798
          %v800 = vand.u32 %v799, 4294901760
          %v801 = vsub.f32 %v799, %v800
          %v802 = vand.u32 %v801, 4294901760
          %803 = vmatpush2.msra.mxu0 %v802
          %804 = vmatprep.subr.mxu0 0.0
          %v805 = vand.u32 %v515, 4294901760
          %v806 = vsub.f32 %v515, %v805
          %v807 = vand.u32 %v806, 4294901760
          %v808 = vsub.f32 %v806, %v807
          %v809 = vand.u32 %v808, 4294901760
          %810 = vmatpush2.msra.mxu0 %v809
          %811 = vmatprep.subr.mxu0 0.0
          %v812 = vand.u32 %v514, 4294901760
          %v813 = vsub.f32 %v514, %v812
          %v814 = vand.u32 %v813, 4294901760
          %v815 = vsub.f32 %v813, %v814
          %v816 = vand.u32 %v815, 4294901760
          %817 = vmatpush2.msra.mxu0 %v816
          %818 = vmatprep.subr.mxu0 0.0
          %v819 = vand.u32 %v513, 4294901760
          %v820 = vsub.f32 %v513, %v819
          %v821 = vand.u32 %v820, 4294901760
          %v822 = vsub.f32 %v820, %v821
          %v823 = vand.u32 %v822, 4294901760
          %824 = vmatpush2.msra.mxu0 %v823
          %825 = vmatprep.subr.mxu0 0.0
          %v826 = vand.u32 %v512, 4294901760
          %v827 = vsub.f32 %v512, %v826
          %v828 = vand.u32 %v827, 4294901760
          %v829 = vsub.f32 %v827, %v828
          %v830 = vand.u32 %v829, 4294901760
          %831 = vmatpush2.msra.mxu0 %v830
          %832 = vmatprep.subr.mxu0 0.0
          %v833 = vand.u32 %v511, 4294901760
          %v834 = vsub.f32 %v511, %v833
          %v835 = vand.u32 %v834, 4294901760
          %v836 = vsub.f32 %v834, %v835
          %v837 = vand.u32 %v836, 4294901760
          %838 = vmatpush2.msra.mxu0 %v837
          %839 = vmatprep.subr.mxu0 0.0
          %v840 = vand.u32 %v510, 4294901760
          %v841 = vsub.f32 %v510, %v840
          %v842 = vand.u32 %v841, 4294901760
          %v843 = vsub.f32 %v841, %v842
          %v844 = vand.u32 %v843, 4294901760
          %845 = vmatpush2.msra.mxu0 %v844
          %846 = vmatprep.subr.mxu0 0.0
          %v847 = vand.u32 %v509, 4294901760
          %v848 = vsub.f32 %v509, %v847
          %v849 = vand.u32 %v848, 4294901760
          %v850 = vsub.f32 %v848, %v849
          %v851 = vand.u32 %v850, 4294901760
          %852 = vmatpush2.msra.mxu0 %v851
          %853 = vmatprep.subr.mxu0 0.0
          %v854 = vand.u32 %v508, 4294901760
          %v855 = vsub.f32 %v508, %v854
          %v856 = vand.u32 %v855, 4294901760
          %v857 = vsub.f32 %v855, %v856
          %v858 = vand.u32 %v857, 4294901760
          %859 = vmatpush2.msra.mxu0 %v858
          %v860 = vand.u32 %v491, 4294901760
          %861 = vmatprep.mubr.f32.mxu0 %v860
          %v862 = vand.u32 %v488, 4294901760
          %863 = vmatmul.mubr.f32.gmra.mxu0 %v862
          %v864 = vpop.f32.mrf.mxu0
          %v865 = vadd.f32 %v633, %v864
          %v866 = vpop.f32.mrf.mxu0
          %867 = vdwg.mxu0
          %868 = vmatprep.subr.mxu0 0.0
          %v869 = vand.u32 %v507, 4294901760
          %v870 = vsub.f32 %v507, %v869
          %871 = vmatpush1.msra.mxu0 %v870
          %872 = vmatprep.subr.mxu0 0.0
          %v873 = vand.u32 %v506, 4294901760
          %v874 = vsub.f32 %v506, %v873
          %875 = vmatpush1.msra.mxu0 %v874
          %876 = vmatprep.subr.mxu0 0.0
          %v877 = vand.u32 %v505, 4294901760
          %v878 = vsub.f32 %v505, %v877
          %879 = vmatpush1.msra.mxu0 %v878
          %880 = vmatprep.subr.mxu0 0.0
          %v881 = vand.u32 %v504, 4294901760
          %v882 = vsub.f32 %v504, %v881
          %883 = vmatpush1.msra.mxu0 %v882
          %884 = vmatprep.subr.mxu0 0.0
          %v885 = vand.u32 %v503, 4294901760
          %v886 = vsub.f32 %v503, %v885
          %887 = vmatpush1.msra.mxu0 %v886
          %888 = vmatprep.subr.mxu0 0.0
          %v889 = vand.u32 %v502, 4294901760
          %v890 = vsub.f32 %v502, %v889
          %891 = vmatpush1.msra.mxu0 %v890
          %892 = vmatprep.subr.mxu0 0.0
          %v893 = vand.u32 %v501, 4294901760
          %v894 = vsub.f32 %v501, %v893
          %895 = vmatpush1.msra.mxu0 %v894
          %896 = vmatprep.subr.mxu0 0.0
          %v897 = vand.u32 %v500, 4294901760
          %v898 = vsub.f32 %v500, %v897
          %899 = vmatpush1.msra.mxu0 %v898
          %900 = vmatprep.subr.mxu0 0.0
          %v901 = vand.u32 %v499, 4294901760
          %v902 = vsub.f32 %v499, %v901
          %903 = vmatpush1.msra.mxu0 %v902
          %904 = vmatprep.subr.mxu0 0.0
          %v905 = vand.u32 %v498, 4294901760
          %v906 = vsub.f32 %v498, %v905
          %907 = vmatpush1.msra.mxu0 %v906
          %908 = vmatprep.subr.mxu0 0.0
          %v909 = vand.u32 %v497, 4294901760
          %v910 = vsub.f32 %v497, %v909
          %911 = vmatpush1.msra.mxu0 %v910
          %912 = vmatprep.subr.mxu0 0.0
          %v913 = vand.u32 %v496, 4294901760
          %v914 = vsub.f32 %v496, %v913
          %915 = vmatpush1.msra.mxu0 %v914
          %916 = vmatprep.subr.mxu0 0.0
          %v917 = vand.u32 %v495, 4294901760
          %v918 = vsub.f32 %v495, %v917
          %919 = vmatpush1.msra.mxu0 %v918
          %920 = vmatprep.subr.mxu0 0.0
          %v921 = vand.u32 %v494, 4294901760
          %v922 = vsub.f32 %v494, %v921
          %923 = vmatpush1.msra.mxu0 %v922
          %924 = vmatprep.subr.mxu0 0.0
          %v925 = vand.u32 %v493, 4294901760
          %v926 = vsub.f32 %v493, %v925
          %927 = vmatpush1.msra.mxu0 %v926
          %928 = vmatprep.subr.mxu0 0.0
          %v929 = vand.u32 %v492, 4294901760
          %v930 = vsub.f32 %v492, %v929
          %931 = vmatpush1.msra.mxu0 %v930
          %932 = vmatprep.subr.mxu0 0.0
          %v933 = vand.u32 %v523, 4294901760
          %v934 = vsub.f32 %v523, %v933
          %935 = vmatpush2.msra.mxu0 %v934
          %936 = vmatprep.subr.mxu0 0.0
          %v937 = vand.u32 %v522, 4294901760
          %v938 = vsub.f32 %v522, %v937
          %939 = vmatpush2.msra.mxu0 %v938
          %940 = vmatprep.subr.mxu0 0.0
          %v941 = vand.u32 %v521, 4294901760
          %v942 = vsub.f32 %v521, %v941
          %943 = vmatpush2.msra.mxu0 %v942
          %944 = vmatprep.subr.mxu0 0.0
          %v945 = vand.u32 %v520, 4294901760
          %v946 = vsub.f32 %v520, %v945
          %947 = vmatpush2.msra.mxu0 %v946
          %948 = vmatprep.subr.mxu0 0.0
          %v949 = vand.u32 %v519, 4294901760
          %v950 = vsub.f32 %v519, %v949
          %951 = vmatpush2.msra.mxu0 %v950
          %952 = vmatprep.subr.mxu0 0.0
          %v953 = vand.u32 %v518, 4294901760
          %v954 = vsub.f32 %v518, %v953
          %955 = vmatpush2.msra.mxu0 %v954
          %956 = vmatprep.subr.mxu0 0.0
          %v957 = vand.u32 %v517, 4294901760
          %v958 = vsub.f32 %v517, %v957
          %959 = vmatpush2.msra.mxu0 %v958
          %960 = vmatprep.subr.mxu0 0.0
          %v961 = vand.u32 %v516, 4294901760
          %v962 = vsub.f32 %v516, %v961
          %963 = vmatpush2.msra.mxu0 %v962
          %964 = vmatprep.subr.mxu0 0.0
          %v965 = vand.u32 %v515, 4294901760
          %v966 = vsub.f32 %v515, %v965
          %967 = vmatpush2.msra.mxu0 %v966
          %968 = vmatprep.subr.mxu0 0.0
          %v969 = vand.u32 %v514, 4294901760
          %v970 = vsub.f32 %v514, %v969
          %971 = vmatpush2.msra.mxu0 %v970
          %972 = vmatprep.subr.mxu0 0.0
          %v973 = vand.u32 %v513, 4294901760
          %v974 = vsub.f32 %v513, %v973
          %975 = vmatpush2.msra.mxu0 %v974
          %976 = vmatprep.subr.mxu0 0.0
          %v977 = vand.u32 %v512, 4294901760
          %v978 = vsub.f32 %v512, %v977
          %979 = vmatpush2.msra.mxu0 %v978
          %980 = vmatprep.subr.mxu0 0.0
          %v981 = vand.u32 %v511, 4294901760
          %v982 = vsub.f32 %v511, %v981
          %983 = vmatpush2.msra.mxu0 %v982
          %984 = vmatprep.subr.mxu0 0.0
          %v985 = vand.u32 %v510, 4294901760
          %v986 = vsub.f32 %v510, %v985
          %987 = vmatpush2.msra.mxu0 %v986
          %988 = vmatprep.subr.mxu0 0.0
          %v989 = vand.u32 %v509, 4294901760
          %v990 = vsub.f32 %v509, %v989
          %991 = vmatpush2.msra.mxu0 %v990
          %992 = vmatprep.subr.mxu0 0.0
          %v993 = vand.u32 %v508, 4294901760
          %v994 = vsub.f32 %v508, %v993
          %995 = vmatpush2.msra.mxu0 %v994
          %v996 = vand.u32 %v491, 4294901760
          %v997 = vsub.f32 %v491, %v996
          %998 = vmatprep.mubr.f32.mxu0 %v997
          %v999 = vand.u32 %v488, 4294901760
          %v1000 = vsub.f32 %v488, %v999
          %1001 = vmatmul.mubr.f32.gmra.mxu0 %v1000
          %v1002 = vpop.f32.mrf.mxu0
          %v1003 = vadd.f32 %v865, %v1002
          %v1004 = vpop.f32.mrf.mxu0
          %1005 = vdwg.mxu0
          %1006 = vmatprep.subr.mxu0 0.0
          %v1007 = vand.u32 %v507, 4294901760
          %1008 = vmatpush1.msra.mxu0 %v1007
          %1009 = vmatprep.subr.mxu0 0.0
          %v1010 = vand.u32 %v506, 4294901760
          %1011 = vmatpush1.msra.mxu0 %v1010
          %1012 = vmatprep.subr.mxu0 0.0
          %v1013 = vand.u32 %v505, 4294901760
          %1014 = vmatpush1.msra.mxu0 %v1013
          %1015 = vmatprep.subr.mxu0 0.0
          %v1016 = vand.u32 %v504, 4294901760
          %1017 = vmatpush1.msra.mxu0 %v1016
          %1018 = vmatprep.subr.mxu0 0.0
          %v1019 = vand.u32 %v503, 4294901760
          %1020 = vmatpush1.msra.mxu0 %v1019
          %1021 = vmatprep.subr.mxu0 0.0
          %v1022 = vand.u32 %v502, 4294901760
          %1023 = vmatpush1.msra.mxu0 %v1022
          %1024 = vmatprep.subr.mxu0 0.0
          %v1025 = vand.u32 %v501, 4294901760
          %1026 = vmatpush1.msra.mxu0 %v1025
          %1027 = vmatprep.subr.mxu0 0.0
          %v1028 = vand.u32 %v500, 4294901760
          %1029 = vmatpush1.msra.mxu0 %v1028
          %1030 = vmatprep.subr.mxu0 0.0
          %v1031 = vand.u32 %v499, 4294901760
          %1032 = vmatpush1.msra.mxu0 %v1031
          %1033 = vmatprep.subr.mxu0 0.0
          %v1034 = vand.u32 %v498, 4294901760
          %1035 = vmatpush1.msra.mxu0 %v1034
          %1036 = vmatprep.subr.mxu0 0.0
          %v1037 = vand.u32 %v497, 4294901760
          %1038 = vmatpush1.msra.mxu0 %v1037
          %1039 = vmatprep.subr.mxu0 0.0
          %v1040 = vand.u32 %v496, 4294901760
          %1041 = vmatpush1.msra.mxu0 %v1040
          %1042 = vmatprep.subr.mxu0 0.0
          %v1043 = vand.u32 %v495, 4294901760
          %1044 = vmatpush1.msra.mxu0 %v1043
          %1045 = vmatprep.subr.mxu0 0.0
          %v1046 = vand.u32 %v494, 4294901760
          %1047 = vmatpush1.msra.mxu0 %v1046
          %1048 = vmatprep.subr.mxu0 0.0
          %v1049 = vand.u32 %v493, 4294901760
          %1050 = vmatpush1.msra.mxu0 %v1049
          %1051 = vmatprep.subr.mxu0 0.0
          %v1052 = vand.u32 %v492, 4294901760
          %1053 = vmatpush1.msra.mxu0 %v1052
          %1054 = vmatprep.subr.mxu0 0.0
          %v1055 = vand.u32 %v523, 4294901760
          %1056 = vmatpush2.msra.mxu0 %v1055
          %1057 = vmatprep.subr.mxu0 0.0
          %v1058 = vand.u32 %v522, 4294901760
          %1059 = vmatpush2.msra.mxu0 %v1058
          %1060 = vmatprep.subr.mxu0 0.0
          %v1061 = vand.u32 %v521, 4294901760
          %1062 = vmatpush2.msra.mxu0 %v1061
          %1063 = vmatprep.subr.mxu0 0.0
          %v1064 = vand.u32 %v520, 4294901760
          %1065 = vmatpush2.msra.mxu0 %v1064
          %1066 = vmatprep.subr.mxu0 0.0
          %v1067 = vand.u32 %v519, 4294901760
          %1068 = vmatpush2.msra.mxu0 %v1067
          %1069 = vmatprep.subr.mxu0 0.0
          %v1070 = vand.u32 %v518, 4294901760
          %1071 = vmatpush2.msra.mxu0 %v1070
          %1072 = vmatprep.subr.mxu0 0.0
          %v1073 = vand.u32 %v517, 4294901760
          %1074 = vmatpush2.msra.mxu0 %v1073
          %1075 = vmatprep.subr.mxu0 0.0
          %v1076 = vand.u32 %v516, 4294901760
          %1077 = vmatpush2.msra.mxu0 %v1076
          %1078 = vmatprep.subr.mxu0 0.0
          %v1079 = vand.u32 %v515, 4294901760
          %1080 = vmatpush2.msra.mxu0 %v1079
          %1081 = vmatprep.subr.mxu0 0.0
          %v1082 = vand.u32 %v514, 4294901760
          %1083 = vmatpush2.msra.mxu0 %v1082
          %1084 = vmatprep.subr.mxu0 0.0
          %v1085 = vand.u32 %v513, 4294901760
          %1086 = vmatpush2.msra.mxu0 %v1085
          %1087 = vmatprep.subr.mxu0 0.0
          %v1088 = vand.u32 %v512, 4294901760
          %1089 = vmatpush2.msra.mxu0 %v1088
          %1090 = vmatprep.subr.mxu0 0.0
          %v1091 = vand.u32 %v511, 4294901760
          %1092 = vmatpush2.msra.mxu0 %v1091
          %1093 = vmatprep.subr.mxu0 0.0
          %v1094 = vand.u32 %v510, 4294901760
          %1095 = vmatpush2.msra.mxu0 %v1094
          %1096 = vmatprep.subr.mxu0 0.0
          %v1097 = vand.u32 %v509, 4294901760
          %1098 = vmatpush2.msra.mxu0 %v1097
          %1099 = vmatprep.subr.mxu0 0.0
          %v1100 = vand.u32 %v508, 4294901760
          %1101 = vmatpush2.msra.mxu0 %v1100
          %v1102 = vand.u32 %v491, 4294901760
          %v1103 = vsub.f32 %v491, %v1102
          %v1104 = vand.u32 %v1103, 4294901760
          %1105 = vmatprep.mubr.f32.mxu0 %v1104
          %v1106 = vand.u32 %v488, 4294901760
          %v1107 = vsub.f32 %v488, %v1106
          %v1108 = vand.u32 %v1107, 4294901760
          %1109 = vmatmul.mubr.f32.gmra.mxu0 %v1108
          %v1110 = vpop.f32.mrf.mxu0
          %v1111 = vadd.f32 %v1003, %v1110
          %v1112 = vpop.f32.mrf.mxu0
          %1113 = vdwg.mxu0
          %1114 = vmatprep.subr.mxu0 0.0
          %v1115 = vand.u32 %v507, 4294901760
          %v1116 = vsub.f32 %v507, %v1115
          %v1117 = vand.u32 %v1116, 4294901760
          %1118 = vmatpush1.msra.mxu0 %v1117
          %1119 = vmatprep.subr.mxu0 0.0
          %v1120 = vand.u32 %v506, 4294901760
          %v1121 = vsub.f32 %v506, %v1120
          %v1122 = vand.u32 %v1121, 4294901760
          %1123 = vmatpush1.msra.mxu0 %v1122
          %1124 = vmatprep.subr.mxu0 0.0
          %v1125 = vand.u32 %v505, 4294901760
          %v1126 = vsub.f32 %v505, %v1125
          %v1127 = vand.u32 %v1126, 4294901760
          %1128 = vmatpush1.msra.mxu0 %v1127
          %1129 = vmatprep.subr.mxu0 0.0
          %v1130 = vand.u32 %v504, 4294901760
          %v1131 = vsub.f32 %v504, %v1130
          %v1132 = vand.u32 %v1131, 4294901760
          %1133 = vmatpush1.msra.mxu0 %v1132
          %1134 = vmatprep.subr.mxu0 0.0
          %v1135 = vand.u32 %v503, 4294901760
          %v1136 = vsub.f32 %v503, %v1135
          %v1137 = vand.u32 %v1136, 4294901760
          %1138 = vmatpush1.msra.mxu0 %v1137
          %1139 = vmatprep.subr.mxu0 0.0
          %v1140 = vand.u32 %v502, 4294901760
          %v1141 = vsub.f32 %v502, %v1140
          %v1142 = vand.u32 %v1141, 4294901760
          %1143 = vmatpush1.msra.mxu0 %v1142
          %1144 = vmatprep.subr.mxu0 0.0
          %v1145 = vand.u32 %v501, 4294901760
          %v1146 = vsub.f32 %v501, %v1145
          %v1147 = vand.u32 %v1146, 4294901760
          %1148 = vmatpush1.msra.mxu0 %v1147
          %1149 = vmatprep.subr.mxu0 0.0
          %v1150 = vand.u32 %v500, 4294901760
          %v1151 = vsub.f32 %v500, %v1150
          %v1152 = vand.u32 %v1151, 4294901760
          %1153 = vmatpush1.msra.mxu0 %v1152
          %1154 = vmatprep.subr.mxu0 0.0
          %v1155 = vand.u32 %v499, 4294901760
          %v1156 = vsub.f32 %v499, %v1155
          %v1157 = vand.u32 %v1156, 4294901760
          %1158 = vmatpush1.msra.mxu0 %v1157
          %1159 = vmatprep.subr.mxu0 0.0
          %v1160 = vand.u32 %v498, 4294901760
          %v1161 = vsub.f32 %v498, %v1160
          %v1162 = vand.u32 %v1161, 4294901760
          %1163 = vmatpush1.msra.mxu0 %v1162
          %1164 = vmatprep.subr.mxu0 0.0
          %v1165 = vand.u32 %v497, 4294901760
          %v1166 = vsub.f32 %v497, %v1165
          %v1167 = vand.u32 %v1166, 4294901760
          %1168 = vmatpush1.msra.mxu0 %v1167
          %1169 = vmatprep.subr.mxu0 0.0
          %v1170 = vand.u32 %v496, 4294901760
          %v1171 = vsub.f32 %v496, %v1170
          %v1172 = vand.u32 %v1171, 4294901760
          %1173 = vmatpush1.msra.mxu0 %v1172
          %1174 = vmatprep.subr.mxu0 0.0
          %v1175 = vand.u32 %v495, 4294901760
          %v1176 = vsub.f32 %v495, %v1175
          %v1177 = vand.u32 %v1176, 4294901760
          %1178 = vmatpush1.msra.mxu0 %v1177
          %1179 = vmatprep.subr.mxu0 0.0
          %v1180 = vand.u32 %v494, 4294901760
          %v1181 = vsub.f32 %v494, %v1180
          %v1182 = vand.u32 %v1181, 4294901760
          %1183 = vmatpush1.msra.mxu0 %v1182
          %1184 = vmatprep.subr.mxu0 0.0
          %v1185 = vand.u32 %v493, 4294901760
          %v1186 = vsub.f32 %v493, %v1185
          %v1187 = vand.u32 %v1186, 4294901760
          %1188 = vmatpush1.msra.mxu0 %v1187
          %1189 = vmatprep.subr.mxu0 0.0
          %v1190 = vand.u32 %v492, 4294901760
          %v1191 = vsub.f32 %v492, %v1190
          %v1192 = vand.u32 %v1191, 4294901760
          %1193 = vmatpush1.msra.mxu0 %v1192
          %1194 = vmatprep.subr.mxu0 0.0
          %v1195 = vand.u32 %v523, 4294901760
          %v1196 = vsub.f32 %v523, %v1195
          %v1197 = vand.u32 %v1196, 4294901760
          %1198 = vmatpush2.msra.mxu0 %v1197
          %1199 = vmatprep.subr.mxu0 0.0
          %v1200 = vand.u32 %v522, 4294901760
          %v1201 = vsub.f32 %v522, %v1200
          %v1202 = vand.u32 %v1201, 4294901760
          %1203 = vmatpush2.msra.mxu0 %v1202
          %1204 = vmatprep.subr.mxu0 0.0
          %v1205 = vand.u32 %v521, 4294901760
          %v1206 = vsub.f32 %v521, %v1205
          %v1207 = vand.u32 %v1206, 4294901760
          %1208 = vmatpush2.msra.mxu0 %v1207
          %1209 = vmatprep.subr.mxu0 0.0
          %v1210 = vand.u32 %v520, 4294901760
          %v1211 = vsub.f32 %v520, %v1210
          %v1212 = vand.u32 %v1211, 4294901760
          %1213 = vmatpush2.msra.mxu0 %v1212
          %1214 = vmatprep.subr.mxu0 0.0
          %v1215 = vand.u32 %v519, 4294901760
          %v1216 = vsub.f32 %v519, %v1215
          %v1217 = vand.u32 %v1216, 4294901760
          %1218 = vmatpush2.msra.mxu0 %v1217
          %1219 = vmatprep.subr.mxu0 0.0
          %v1220 = vand.u32 %v518, 4294901760
          %v1221 = vsub.f32 %v518, %v1220
          %v1222 = vand.u32 %v1221, 4294901760
          %1223 = vmatpush2.msra.mxu0 %v1222
          %1224 = vmatprep.subr.mxu0 0.0
          %v1225 = vand.u32 %v517, 4294901760
          %v1226 = vsub.f32 %v517, %v1225
          %v1227 = vand.u32 %v1226, 4294901760
          %1228 = vmatpush2.msra.mxu0 %v1227
          %1229 = vmatprep.subr.mxu0 0.0
          %v1230 = vand.u32 %v516, 4294901760
          %v1231 = vsub.f32 %v516, %v1230
          %v1232 = vand.u32 %v1231, 4294901760
          %1233 = vmatpush2.msra.mxu0 %v1232
          %1234 = vmatprep.subr.mxu0 0.0
          %v1235 = vand.u32 %v515, 4294901760
          %v1236 = vsub.f32 %v515, %v1235
          %v1237 = vand.u32 %v1236, 4294901760
          %1238 = vmatpush2.msra.mxu0 %v1237
          %1239 = vmatprep.subr.mxu0 0.0
          %v1240 = vand.u32 %v514, 4294901760
          %v1241 = vsub.f32 %v514, %v1240
          %v1242 = vand.u32 %v1241, 4294901760
          %1243 = vmatpush2.msra.mxu0 %v1242
          %1244 = vmatprep.subr.mxu0 0.0
          %v1245 = vand.u32 %v513, 4294901760
          %v1246 = vsub.f32 %v513, %v1245
          %v1247 = vand.u32 %v1246, 4294901760
          %1248 = vmatpush2.msra.mxu0 %v1247
          %1249 = vmatprep.subr.mxu0 0.0
          %v1250 = vand.u32 %v512, 4294901760
          %v1251 = vsub.f32 %v512, %v1250
          %v1252 = vand.u32 %v1251, 4294901760
          %1253 = vmatpush2.msra.mxu0 %v1252
          %1254 = vmatprep.subr.mxu0 0.0
          %v1255 = vand.u32 %v511, 4294901760
          %v1256 = vsub.f32 %v511, %v1255
          %v1257 = vand.u32 %v1256, 4294901760
          %1258 = vmatpush2.msra.mxu0 %v1257
          %1259 = vmatprep.subr.mxu0 0.0
          %v1260 = vand.u32 %v510, 4294901760
          %v1261 = vsub.f32 %v510, %v1260
          %v1262 = vand.u32 %v1261, 4294901760
          %1263 = vmatpush2.msra.mxu0 %v1262
          %1264 = vmatprep.subr.mxu0 0.0
          %v1265 = vand.u32 %v509, 4294901760
          %v1266 = vsub.f32 %v509, %v1265
          %v1267 = vand.u32 %v1266, 4294901760
          %1268 = vmatpush2.msra.mxu0 %v1267
          %1269 = vmatprep.subr.mxu0 0.0
          %v1270 = vand.u32 %v508, 4294901760
          %v1271 = vsub.f32 %v508, %v1270
          %v1272 = vand.u32 %v1271, 4294901760
          %1273 = vmatpush2.msra.mxu0 %v1272
          %v1274 = vand.u32 %v491, 4294901760
          %1275 = vmatprep.mubr.f32.mxu0 %v1274
          %v1276 = vand.u32 %v488, 4294901760
          %1277 = vmatmul.mubr.f32.gmra.mxu0 %v1276
          %v1278 = vpop.f32.mrf.mxu0
          %v1279 = vadd.f32 %v1111, %v1278
          %v1280 = vpop.f32.mrf.mxu0
          %1281 = vdwg.mxu0
          %1282 = vmatprep.subr.mxu0 0.0
          %v1283 = vand.u32 %v507, 4294901760
          %1284 = vmatpush1.msra.mxu0 %v1283
          %1285 = vmatprep.subr.mxu0 0.0
          %v1286 = vand.u32 %v506, 4294901760
          %1287 = vmatpush1.msra.mxu0 %v1286
          %1288 = vmatprep.subr.mxu0 0.0
          %v1289 = vand.u32 %v505, 4294901760
          %1290 = vmatpush1.msra.mxu0 %v1289
          %1291 = vmatprep.subr.mxu0 0.0
          %v1292 = vand.u32 %v504, 4294901760
          %1293 = vmatpush1.msra.mxu0 %v1292
          %1294 = vmatprep.subr.mxu0 0.0
          %v1295 = vand.u32 %v503, 4294901760
          %1296 = vmatpush1.msra.mxu0 %v1295
          %1297 = vmatprep.subr.mxu0 0.0
          %v1298 = vand.u32 %v502, 4294901760
          %1299 = vmatpush1.msra.mxu0 %v1298
          %1300 = vmatprep.subr.mxu0 0.0
          %v1301 = vand.u32 %v501, 4294901760
          %1302 = vmatpush1.msra.mxu0 %v1301
          %1303 = vmatprep.subr.mxu0 0.0
          %v1304 = vand.u32 %v500, 4294901760
          %1305 = vmatpush1.msra.mxu0 %v1304
          %1306 = vmatprep.subr.mxu0 0.0
          %v1307 = vand.u32 %v499, 4294901760
          %1308 = vmatpush1.msra.mxu0 %v1307
          %1309 = vmatprep.subr.mxu0 0.0
          %v1310 = vand.u32 %v498, 4294901760
          %1311 = vmatpush1.msra.mxu0 %v1310
          %1312 = vmatprep.subr.mxu0 0.0
          %v1313 = vand.u32 %v497, 4294901760
          %1314 = vmatpush1.msra.mxu0 %v1313
          %1315 = vmatprep.subr.mxu0 0.0
          %v1316 = vand.u32 %v496, 4294901760
          %1317 = vmatpush1.msra.mxu0 %v1316
          %1318 = vmatprep.subr.mxu0 0.0
          %v1319 = vand.u32 %v495, 4294901760
          %1320 = vmatpush1.msra.mxu0 %v1319
          %1321 = vmatprep.subr.mxu0 0.0
          %v1322 = vand.u32 %v494, 4294901760
          %1323 = vmatpush1.msra.mxu0 %v1322
          %1324 = vmatprep.subr.mxu0 0.0
          %v1325 = vand.u32 %v493, 4294901760
          %1326 = vmatpush1.msra.mxu0 %v1325
          %1327 = vmatprep.subr.mxu0 0.0
          %v1328 = vand.u32 %v492, 4294901760
          %1329 = vmatpush1.msra.mxu0 %v1328
          %1330 = vmatprep.subr.mxu0 0.0
          %v1331 = vand.u32 %v523, 4294901760
          %1332 = vmatpush2.msra.mxu0 %v1331
          %1333 = vmatprep.subr.mxu0 0.0
          %v1334 = vand.u32 %v522, 4294901760
          %1335 = vmatpush2.msra.mxu0 %v1334
          %1336 = vmatprep.subr.mxu0 0.0
          %v1337 = vand.u32 %v521, 4294901760
          %1338 = vmatpush2.msra.mxu0 %v1337
          %1339 = vmatprep.subr.mxu0 0.0
          %v1340 = vand.u32 %v520, 4294901760
          %1341 = vmatpush2.msra.mxu0 %v1340
          %1342 = vmatprep.subr.mxu0 0.0
          %v1343 = vand.u32 %v519, 4294901760
          %1344 = vmatpush2.msra.mxu0 %v1343
          %1345 = vmatprep.subr.mxu0 0.0
          %v1346 = vand.u32 %v518, 4294901760
          %1347 = vmatpush2.msra.mxu0 %v1346
          %1348 = vmatprep.subr.mxu0 0.0
          %v1349 = vand.u32 %v517, 4294901760
          %1350 = vmatpush2.msra.mxu0 %v1349
          %1351 = vmatprep.subr.mxu0 0.0
          %v1352 = vand.u32 %v516, 4294901760
          %1353 = vmatpush2.msra.mxu0 %v1352
          %1354 = vmatprep.subr.mxu0 0.0
          %v1355 = vand.u32 %v515, 4294901760
          %1356 = vmatpush2.msra.mxu0 %v1355
          %1357 = vmatprep.subr.mxu0 0.0
          %v1358 = vand.u32 %v514, 4294901760
          %1359 = vmatpush2.msra.mxu0 %v1358
          %1360 = vmatprep.subr.mxu0 0.0
          %v1361 = vand.u32 %v513, 4294901760
          %1362 = vmatpush2.msra.mxu0 %v1361
          %1363 = vmatprep.subr.mxu0 0.0
          %v1364 = vand.u32 %v512, 4294901760
          %1365 = vmatpush2.msra.mxu0 %v1364
          %1366 = vmatprep.subr.mxu0 0.0
          %v1367 = vand.u32 %v511, 4294901760
          %1368 = vmatpush2.msra.mxu0 %v1367
          %1369 = vmatprep.subr.mxu0 0.0
          %v1370 = vand.u32 %v510, 4294901760
          %1371 = vmatpush2.msra.mxu0 %v1370
          %1372 = vmatprep.subr.mxu0 0.0
          %v1373 = vand.u32 %v509, 4294901760
          %1374 = vmatpush2.msra.mxu0 %v1373
          %1375 = vmatprep.subr.mxu0 0.0
          %v1376 = vand.u32 %v508, 4294901760
          %1377 = vmatpush2.msra.mxu0 %v1376
          %v1378 = vand.u32 %v491, 4294901760
          %1379 = vmatprep.mubr.f32.mxu0 %v1378
          %v1380 = vand.u32 %v488, 4294901760
          %1381 = vmatmul.mubr.f32.gmra.mxu0 %v1380
          %v1382 = vpop.f32.mrf.mxu0
          %v1383 = vadd.f32 %v1279, %v1382
          %v1384 = vpop.f32.mrf.mxu0
          %1385 = vdwg.mxu0
          %1386 = vst [vmem:[#allocation2] sm:$0xff] %v1383
        $region68: #{tpu_custom_call.1} parent=43 // pred_fallthru
          _
        %v1387 = vld [vmem:[#allocation2] sm:$0xff]
        %s1388 = smul.u32 %s28, 128
        %s1389 = sshra.s32 %s1388, 7
        %s1390 = sand.u32 %s1388, 127
        %s1391 = smul.addr %s1389, 8
        %s1392 = scalar_lea.vmem [#allocation11], %s1391
        %v1393 = vld [vmem:[%s1392] sm:$0xff]
        %v1394 = vld [vmem:[%s1392 + $0x8] sm:$0xff]
        %1396 = vset.pattern.permute.xlu0 0
        %1397 = vperm.xlu0 %1396, %v1387
        %v1398 = vpop.permute.xlu0 %1397
        %v1400 = vmul.f32 %v1398, %v1394
        %v1401 = vadd.f32 %v1400, 0.0
        %1402 = vset.pattern.permute.xlu0 1
        %1403 = vperm.xlu0 %1402, %v1387
        %v1404 = vpop.permute.xlu0 %1403
        %v1406 = vmul.f32 %v1404, %v1393
        %v1407 = vmul.f32 %v1404, %v1394
        %1410 = vrot.lane.b32.xlu0 %v1406, 1
        %v1411 = vpop.permute.xlu0 %1410
        %1412 = vrot.lane.b32.xlu0 %v1407, 1
        %v1413 = vpop.permute.xlu0 %1412
        %vm1414 = vcmask 7168
        %v1415 = vsel %vm1414, %v1411, %v1413
        %v1417 = vadd.f32 %v1401, %v1415
        %1418 = vset.pattern.permute.xlu0 2
        %1419 = vperm.xlu0 %1418, %v1387
        %v1420 = vpop.permute.xlu0 %1419
        %v1422 = vmul.f32 %v1420, %v1393
        %v1423 = vmul.f32 %v1420, %v1394
        %1426 = vrot.lane.b32.xlu0 %v1422, 2
        %v1427 = vpop.permute.xlu0 %1426
        %1428 = vrot.lane.b32.xlu0 %v1423, 2
        %v1429 = vpop.permute.xlu0 %1428
        %vm1430 = vcmask 15360
        %v1431 = vsel %vm1430, %v1427, %v1429
        %v1433 = vadd.f32 %v1417, %v1431
        %1434 = vset.pattern.permute.xlu0 3
        %1435 = vperm.xlu0 %1434, %v1387
        %v1436 = vpop.permute.xlu0 %1435
        %v1438 = vmul.f32 %v1436, %v1393
        %v1439 = vmul.f32 %v1436, %v1394
        %1442 = vrot.lane.b32.xlu0 %v1438, 3
        %v1443 = vpop.permute.xlu0 %1442
        %1444 = vrot.lane.b32.xlu0 %v1439, 3
        %v1445 = vpop.permute.xlu0 %1444
        %vm1446 = vcmask 23552
        %v1447 = vsel %vm1446, %v1443, %v1445
        %v1449 = vadd.f32 %v1433, %v1447
        %1450 = vset.pattern.permute.xlu0 4
        %1451 = vperm.xlu0 %1450, %v1387
        %v1452 = vpop.permute.xlu0 %1451
        %v1454 = vmul.f32 %v1452, %v1393
        %v1455 = vmul.f32 %v1452, %v1394
        %1458 = vrot.lane.b32.xlu0 %v1454, 4
        %v1459 = vpop.permute.xlu0 %1458
        %1460 = vrot.lane.b32.xlu0 %v1455, 4
        %v1461 = vpop.permute.xlu0 %1460
        %vm1462 = vcmask 31744
        %v1463 = vsel %vm1462, %v1459, %v1461
        %v1465 = vadd.f32 %v1449, %v1463
        %1466 = vset.pattern.permute.xlu0 5
        %1467 = vperm.xlu0 %1466, %v1387
        %v1468 = vpop.permute.xlu0 %1467
        %v1470 = vmul.f32 %v1468, %v1393
        %v1471 = vmul.f32 %v1468, %v1394
        %1474 = vrot.lane.b32.xlu0 %v1470, 5
        %v1475 = vpop.permute.xlu0 %1474
        %1476 = vrot.lane.b32.xlu0 %v1471, 5
        %v1477 = vpop.permute.xlu0 %1476
        %vm1478 = vcmask 39936
        %v1479 = vsel %vm1478, %v1475, %v1477
        %v1481 = vadd.f32 %v1465, %v1479
        %1482 = vset.pattern.permute.xlu0 6
        %1483 = vperm.xlu0 %1482, %v1387
        %v1484 = vpop.permute.xlu0 %1483
        %v1486 = vmul.f32 %v1484, %v1393
        %v1487 = vmul.f32 %v1484, %v1394
        %1490 = vrot.lane.b32.xlu0 %v1486, 6
        %v1491 = vpop.permute.xlu0 %1490
        %1492 = vrot.lane.b32.xlu0 %v1487, 6
        %v1493 = vpop.permute.xlu0 %1492
        %vm1494 = vcmask 48128
        %v1495 = vsel %vm1494, %v1491, %v1493
        %v1497 = vadd.f32 %v1481, %v1495
        %1498 = vset.pattern.permute.xlu0 7
        %1499 = vperm.xlu0 %1498, %v1387
        %v1500 = vpop.permute.xlu0 %1499
        %v1502 = vmul.f32 %v1500, %v1393
        %v1503 = vmul.f32 %v1500, %v1394
        %1506 = vrot.lane.b32.xlu0 %v1502, 7
        %v1507 = vpop.permute.xlu0 %1506
        %1508 = vrot.lane.b32.xlu0 %v1503, 7
        %v1509 = vpop.permute.xlu0 %1508
        %vm1510 = vcmask 56320
        %v1511 = vsel %vm1510, %v1507, %v1509
        %v1513 = vadd.f32 %v1497, %v1511
        %1514 = vset.pattern.permute.xlu0 8
        %1515 = vperm.xlu0 %1514, %v1387
        %v1516 = vpop.permute.xlu0 %1515
        %v1518 = vmul.f32 %v1516, %v1393
        %v1519 = vmul.f32 %v1516, %v1394
        %1522 = vrot.lane.b32.xlu0 %v1518, 8
        %v1523 = vpop.permute.xlu0 %1522
        %1524 = vrot.lane.b32.xlu0 %v1519, 8
        %v1525 = vpop.permute.xlu0 %1524
        %vm1526 = vcmask 64512
        %v1527 = vsel %vm1526, %v1523, %v1525
        %v1529 = vadd.f32 %v1513, %v1527
        %1530 = vset.pattern.permute.xlu0 9
        %1531 = vperm.xlu0 %1530, %v1387
        %v1532 = vpop.permute.xlu0 %1531
        %v1534 = vmul.f32 %v1532, %v1393
        %v1535 = vmul.f32 %v1532, %v1394
        %1538 = vrot.lane.b32.xlu0 %v1534, 9
        %v1539 = vpop.permute.xlu0 %1538
        %1540 = vrot.lane.b32.xlu0 %v1535, 9
        %v1541 = vpop.permute.xlu0 %1540
        %vm1542 = vcmask 72704
        %v1543 = vsel %vm1542, %v1539, %v1541
        %v1545 = vadd.f32 %v1529, %v1543
        %1546 = vset.pattern.permute.xlu0 10
        %1547 = vperm.xlu0 %1546, %v1387
        %v1548 = vpop.permute.xlu0 %1547
        %v1550 = vmul.f32 %v1548, %v1393
        %v1551 = vmul.f32 %v1548, %v1394
        %1554 = vrot.lane.b32.xlu0 %v1550, 10
        %v1555 = vpop.permute.xlu0 %1554
        %1556 = vrot.lane.b32.xlu0 %v1551, 10
        %v1557 = vpop.permute.xlu0 %1556
        %vm1558 = vcmask 80896
        %v1559 = vsel %vm1558, %v1555, %v1557
        %v1561 = vadd.f32 %v1545, %v1559
        %1562 = vset.pattern.permute.xlu0 11
        %1563 = vperm.xlu0 %1562, %v1387
        %v1564 = vpop.permute.xlu0 %1563
        %v1566 = vmul.f32 %v1564, %v1393
        %v1567 = vmul.f32 %v1564, %v1394
        %1570 = vrot.lane.b32.xlu0 %v1566, 11
        %v1571 = vpop.permute.xlu0 %1570
        %1572 = vrot.lane.b32.xlu0 %v1567, 11
        %v1573 = vpop.permute.xlu0 %1572
        %vm1574 = vcmask 89088
        %v1575 = vsel %vm1574, %v1571, %v1573
        %v1577 = vadd.f32 %v1561, %v1575
        %1578 = vset.pattern.permute.xlu0 12
        %1579 = vperm.xlu0 %1578, %v1387
        %v1580 = vpop.permute.xlu0 %1579
        %v1582 = vmul.f32 %v1580, %v1393
        %v1583 = vmul.f32 %v1580, %v1394
        %1586 = vrot.lane.b32.xlu0 %v1582, 12
        %v1587 = vpop.permute.xlu0 %1586
        %1588 = vrot.lane.b32.xlu0 %v1583, 12
        %v1589 = vpop.permute.xlu0 %1588
        %vm1590 = vcmask 97280
        %v1591 = vsel %vm1590, %v1587, %v1589
        %v1593 = vadd.f32 %v1577, %v1591
        %1594 = vset.pattern.permute.xlu0 13
        %1595 = vperm.xlu0 %1594, %v1387
        %v1596 = vpop.permute.xlu0 %1595
        %v1598 = vmul.f32 %v1596, %v1393
        %v1599 = vmul.f32 %v1596, %v1394
        %1602 = vrot.lane.b32.xlu0 %v1598, 13
        %v1603 = vpop.permute.xlu0 %1602
        %1604 = vrot.lane.b32.xlu0 %v1599, 13
        %v1605 = vpop.permute.xlu0 %1604
        %vm1606 = vcmask 105472
        %v1607 = vsel %vm1606, %v1603, %v1605
        %v1609 = vadd.f32 %v1593, %v1607
        %1610 = vset.pattern.permute.xlu0 14
        %1611 = vperm.xlu0 %1610, %v1387
        %v1612 = vpop.permute.xlu0 %1611
        %v1614 = vmul.f32 %v1612, %v1393
        %v1615 = vmul.f32 %v1612, %v1394
        %1618 = vrot.lane.b32.xlu0 %v1614, 14
        %v1619 = vpop.permute.xlu0 %1618
        %1620 = vrot.lane.b32.xlu0 %v1615, 14
        %v1621 = vpop.permute.xlu0 %1620
        %vm1622 = vcmask 113664
        %v1623 = vsel %vm1622, %v1619, %v1621
        %v1625 = vadd.f32 %v1609, %v1623
        %1626 = vset.pattern.permute.xlu0 15
        %1627 = vperm.xlu0 %1626, %v1387
        %v1628 = vpop.permute.xlu0 %1627
        %v1630 = vmul.f32 %v1628, %v1393
        %v1631 = vmul.f32 %v1628, %v1394
        %1634 = vrot.lane.b32.xlu0 %v1630, 15
        %v1635 = vpop.permute.xlu0 %1634
        %1636 = vrot.lane.b32.xlu0 %v1631, 15
        %v1637 = vpop.permute.xlu0 %1636
        %vm1638 = vcmask 121856
        %v1639 = vsel %vm1638, %v1635, %v1637
        %v1641 = vadd.f32 %v1625, %v1639
        %1642 = vset.pattern.permute.xlu0 16
        %1643 = vperm.xlu0 %1642, %v1387
        %v1644 = vpop.permute.xlu0 %1643
        %v1646 = vmul.f32 %v1644, %v1393
        %v1647 = vmul.f32 %v1644, %v1394
        %1650 = vrot.lane.b32.xlu0 %v1646, 16
        %v1651 = vpop.permute.xlu0 %1650
        %1652 = vrot.lane.b32.xlu0 %v1647, 16
        %v1653 = vpop.permute.xlu0 %1652
        %vm1654 = vcmask 130048
        %v1655 = vsel %vm1654, %v1651, %v1653
        %v1657 = vadd.f32 %v1641, %v1655
        %1658 = vset.pattern.permute.xlu0 17
        %1659 = vperm.xlu0 %1658, %v1387
        %v1660 = vpop.permute.xlu0 %1659
        %v1662 = vmul.f32 %v1660, %v1393
        %v1663 = vmul.f32 %v1660, %v1394
        %1666 = vrot.lane.b32.xlu0 %v1662, 17
        %v1667 = vpop.permute.xlu0 %1666
        %1668 = vrot.lane.b32.xlu0 %v1663, 17
        %v1669 = vpop.permute.xlu0 %1668
        %vm1670 = vcmask 138240
        %v1671 = vsel %vm1670, %v1667, %v1669
        %v1673 = vadd.f32 %v1657, %v1671
        %1674 = vset.pattern.permute.xlu0 18
        %1675 = vperm.xlu0 %1674, %v1387
        %v1676 = vpop.permute.xlu0 %1675
        %v1678 = vmul.f32 %v1676, %v1393
        %v1679 = vmul.f32 %v1676, %v1394
        %1682 = vrot.lane.b32.xlu0 %v1678, 18
        %v1683 = vpop.permute.xlu0 %1682
        %1684 = vrot.lane.b32.xlu0 %v1679, 18
        %v1685 = vpop.permute.xlu0 %1684
        %vm1686 = vcmask 146432
        %v1687 = vsel %vm1686, %v1683, %v1685
        %v1689 = vadd.f32 %v1673, %v1687
        %1690 = vset.pattern.permute.xlu0 19
        %1691 = vperm.xlu0 %1690, %v1387
        %v1692 = vpop.permute.xlu0 %1691
        %v1694 = vmul.f32 %v1692, %v1393
        %v1695 = vmul.f32 %v1692, %v1394
        %1698 = vrot.lane.b32.xlu0 %v1694, 19
        %v1699 = vpop.permute.xlu0 %1698
        %1700 = vrot.lane.b32.xlu0 %v1695, 19
        %v1701 = vpop.permute.xlu0 %1700
        %vm1702 = vcmask 154624
        %v1703 = vsel %vm1702, %v1699, %v1701
        %v1705 = vadd.f32 %v1689, %v1703
        %1706 = vset.pattern.permute.xlu0 20
        %1707 = vperm.xlu0 %1706, %v1387
        %v1708 = vpop.permute.xlu0 %1707
        %v1710 = vmul.f32 %v1708, %v1393
        %v1711 = vmul.f32 %v1708, %v1394
        %1714 = vrot.lane.b32.xlu0 %v1710, 20
        %v1715 = vpop.permute.xlu0 %1714
        %1716 = vrot.lane.b32.xlu0 %v1711, 20
        %v1717 = vpop.permute.xlu0 %1716
        %vm1718 = vcmask 162816
        %v1719 = vsel %vm1718, %v1715, %v1717
        %v1721 = vadd.f32 %v1705, %v1719
        %1722 = vset.pattern.permute.xlu0 21
        %1723 = vperm.xlu0 %1722, %v1387
        %v1724 = vpop.permute.xlu0 %1723
        %v1726 = vmul.f32 %v1724, %v1393
        %v1727 = vmul.f32 %v1724, %v1394
        %1730 = vrot.lane.b32.xlu0 %v1726, 21
        %v1731 = vpop.permute.xlu0 %1730
        %1732 = vrot.lane.b32.xlu0 %v1727, 21
        %v1733 = vpop.permute.xlu0 %1732
        %vm1734 = vcmask 171008
        %v1735 = vsel %vm1734, %v1731, %v1733
        %v1737 = vadd.f32 %v1721, %v1735
        %1738 = vset.pattern.permute.xlu0 22
        %1739 = vperm.xlu0 %1738, %v1387
        %v1740 = vpop.permute.xlu0 %1739
        %v1742 = vmul.f32 %v1740, %v1393
        %v1743 = vmul.f32 %v1740, %v1394
        %1746 = vrot.lane.b32.xlu0 %v1742, 22
        %v1747 = vpop.permute.xlu0 %1746
        %1748 = vrot.lane.b32.xlu0 %v1743, 22
        %v1749 = vpop.permute.xlu0 %1748
        %vm1750 = vcmask 179200
        %v1751 = vsel %vm1750, %v1747, %v1749
        %v1753 = vadd.f32 %v1737, %v1751
        %1754 = vset.pattern.permute.xlu0 23
        %1755 = vperm.xlu0 %1754, %v1387
        %v1756 = vpop.permute.xlu0 %1755
        %v1758 = vmul.f32 %v1756, %v1393
        %v1759 = vmul.f32 %v1756, %v1394
        %1762 = vrot.lane.b32.xlu0 %v1758, 23
        %v1763 = vpop.permute.xlu0 %1762
        %1764 = vrot.lane.b32.xlu0 %v1759, 23
        %v1765 = vpop.permute.xlu0 %1764
        %vm1766 = vcmask 187392
        %v1767 = vsel %vm1766, %v1763, %v1765
        %v1769 = vadd.f32 %v1753, %v1767
        %1770 = vset.pattern.permute.xlu0 24
        %1771 = vperm.xlu0 %1770, %v1387
        %v1772 = vpop.permute.xlu0 %1771
        %v1774 = vmul.f32 %v1772, %v1393
        %v1775 = vmul.f32 %v1772, %v1394
        %1778 = vrot.lane.b32.xlu0 %v1774, 24
        %v1779 = vpop.permute.xlu0 %1778
        %1780 = vrot.lane.b32.xlu0 %v1775, 24
        %v1781 = vpop.permute.xlu0 %1780
        %vm1782 = vcmask 195584
        %v1783 = vsel %vm1782, %v1779, %v1781
        %v1785 = vadd.f32 %v1769, %v1783
        %1786 = vset.pattern.permute.xlu0 25
        %1787 = vperm.xlu0 %1786, %v1387
        %v1788 = vpop.permute.xlu0 %1787
        %v1790 = vmul.f32 %v1788, %v1393
        %v1791 = vmul.f32 %v1788, %v1394
        %1794 = vrot.lane.b32.xlu0 %v1790, 25
        %v1795 = vpop.permute.xlu0 %1794
        %1796 = vrot.lane.b32.xlu0 %v1791, 25
        %v1797 = vpop.permute.xlu0 %1796
        %vm1798 = vcmask 203776
        %v1799 = vsel %vm1798, %v1795, %v1797
        %v1801 = vadd.f32 %v1785, %v1799
        %1802 = vset.pattern.permute.xlu0 26
        %1803 = vperm.xlu0 %1802, %v1387
        %v1804 = vpop.permute.xlu0 %1803
        %v1806 = vmul.f32 %v1804, %v1393
        %v1807 = vmul.f32 %v1804, %v1394
        %1810 = vrot.lane.b32.xlu0 %v1806, 26
        %v1811 = vpop.permute.xlu0 %1810
        %1812 = vrot.lane.b32.xlu0 %v1807, 26
        %v1813 = vpop.permute.xlu0 %1812
        %vm1814 = vcmask 211968
        %v1815 = vsel %vm1814, %v1811, %v1813
        %v1817 = vadd.f32 %v1801, %v1815
        %1818 = vset.pattern.permute.xlu0 27
        %1819 = vperm.xlu0 %1818, %v1387
        %v1820 = vpop.permute.xlu0 %1819
        %v1822 = vmul.f32 %v1820, %v1393
        %v1823 = vmul.f32 %v1820, %v1394
        %1826 = vrot.lane.b32.xlu0 %v1822, 27
        %v1827 = vpop.permute.xlu0 %1826
        %1828 = vrot.lane.b32.xlu0 %v1823, 27
        %v1829 = vpop.permute.xlu0 %1828
        %vm1830 = vcmask 220160
        %v1831 = vsel %vm1830, %v1827, %v1829
        %v1833 = vadd.f32 %v1817, %v1831
        %1834 = vset.pattern.permute.xlu0 28
        %1835 = vperm.xlu0 %1834, %v1387
        %v1836 = vpop.permute.xlu0 %1835
        %v1838 = vmul.f32 %v1836, %v1393
        %v1839 = vmul.f32 %v1836, %v1394
        %1842 = vrot.lane.b32.xlu0 %v1838, 28
        %v1843 = vpop.permute.xlu0 %1842
        %1844 = vrot.lane.b32.xlu0 %v1839, 28
        %v1845 = vpop.permute.xlu0 %1844
        %vm1846 = vcmask 228352
        %v1847 = vsel %vm1846, %v1843, %v1845
        %v1849 = vadd.f32 %v1833, %v1847
        %1850 = vset.pattern.permute.xlu0 29
        %1851 = vperm.xlu0 %1850, %v1387
        %v1852 = vpop.permute.xlu0 %1851
        %v1854 = vmul.f32 %v1852, %v1393
        %v1855 = vmul.f32 %v1852, %v1394
        %1858 = vrot.lane.b32.xlu0 %v1854, 29
        %v1859 = vpop.permute.xlu0 %1858
        %1860 = vrot.lane.b32.xlu0 %v1855, 29
        %v1861 = vpop.permute.xlu0 %1860
        %vm1862 = vcmask 236544
        %v1863 = vsel %vm1862, %v1859, %v1861
        %v1865 = vadd.f32 %v1849, %v1863
        %1866 = vset.pattern.permute.xlu0 30
        %1867 = vperm.xlu0 %1866, %v1387
        %v1868 = vpop.permute.xlu0 %1867
        %v1870 = vmul.f32 %v1868, %v1393
        %v1871 = vmul.f32 %v1868, %v1394
        %1874 = vrot.lane.b32.xlu0 %v1870, 30
        %v1875 = vpop.permute.xlu0 %1874
        %1876 = vrot.lane.b32.xlu0 %v1871, 30
        %v1877 = vpop.permute.xlu0 %1876
        %vm1878 = vcmask 244736
        %v1879 = vsel %vm1878, %v1875, %v1877
        %v1881 = vadd.f32 %v1865, %v1879
        %1882 = vset.pattern.permute.xlu0 31
        %1883 = vperm.xlu0 %1882, %v1387
        %v1884 = vpop.permute.xlu0 %1883
        %v1886 = vmul.f32 %v1884, %v1393
        %v1887 = vmul.f32 %v1884, %v1394
        %1890 = vrot.lane.b32.xlu0 %v1886, 31
        %v1891 = vpop.permute.xlu0 %1890
        %1892 = vrot.lane.b32.xlu0 %v1887, 31
        %v1893 = vpop.permute.xlu0 %1892
        %vm1894 = vcmask 252928
        %v1895 = vsel %vm1894, %v1891, %v1893
        %v1897 = vadd.f32 %v1881, %v1895
        %1898 = vset.pattern.permute.xlu0 32
        %1899 = vperm.xlu0 %1898, %v1387
        %v1900 = vpop.permute.xlu0 %1899
        %v1902 = vmul.f32 %v1900, %v1393
        %v1903 = vmul.f32 %v1900, %v1394
        %1906 = vrot.lane.b32.xlu0 %v1902, 32
        %v1907 = vpop.permute.xlu0 %1906
        %1908 = vrot.lane.b32.xlu0 %v1903, 32
        %v1909 = vpop.permute.xlu0 %1908
        %vm1910 = vcmask 261120
        %v1911 = vsel %vm1910, %v1907, %v1909
        %v1913 = vadd.f32 %v1897, %v1911
        %1914 = vset.pattern.permute.xlu0 33
        %1915 = vperm.xlu0 %1914, %v1387
        %v1916 = vpop.permute.xlu0 %1915
        %v1918 = vmul.f32 %v1916, %v1393
        %v1919 = vmul.f32 %v1916, %v1394
        %1922 = vrot.lane.b32.xlu0 %v1918, 33
        %v1923 = vpop.permute.xlu0 %1922
        %1924 = vrot.lane.b32.xlu0 %v1919, 33
        %v1925 = vpop.permute.xlu0 %1924
        %vm1926 = vcmask 269312
        %v1927 = vsel %vm1926, %v1923, %v1925
        %v1929 = vadd.f32 %v1913, %v1927
        %1930 = vset.pattern.permute.xlu0 34
        %1931 = vperm.xlu0 %1930, %v1387
        %v1932 = vpop.permute.xlu0 %1931
        %v1934 = vmul.f32 %v1932, %v1393
        %v1935 = vmul.f32 %v1932, %v1394
        %1938 = vrot.lane.b32.xlu0 %v1934, 34
        %v1939 = vpop.permute.xlu0 %1938
        %1940 = vrot.lane.b32.xlu0 %v1935, 34
        %v1941 = vpop.permute.xlu0 %1940
        %vm1942 = vcmask 277504
        %v1943 = vsel %vm1942, %v1939, %v1941
        %v1945 = vadd.f32 %v1929, %v1943
        %1946 = vset.pattern.permute.xlu0 35
        %1947 = vperm.xlu0 %1946, %v1387
        %v1948 = vpop.permute.xlu0 %1947
        %v1950 = vmul.f32 %v1948, %v1393
        %v1951 = vmul.f32 %v1948, %v1394
        %1954 = vrot.lane.b32.xlu0 %v1950, 35
        %v1955 = vpop.permute.xlu0 %1954
        %1956 = vrot.lane.b32.xlu0 %v1951, 35
        %v1957 = vpop.permute.xlu0 %1956
        %vm1958 = vcmask 285696
        %v1959 = vsel %vm1958, %v1955, %v1957
        %v1961 = vadd.f32 %v1945, %v1959
        %1962 = vset.pattern.permute.xlu0 36
        %1963 = vperm.xlu0 %1962, %v1387
        %v1964 = vpop.permute.xlu0 %1963
        %v1966 = vmul.f32 %v1964, %v1393
        %v1967 = vmul.f32 %v1964, %v1394
        %1970 = vrot.lane.b32.xlu0 %v1966, 36
        %v1971 = vpop.permute.xlu0 %1970
        %1972 = vrot.lane.b32.xlu0 %v1967, 36
        %v1973 = vpop.permute.xlu0 %1972
        %vm1974 = vcmask 293888
        %v1975 = vsel %vm1974, %v1971, %v1973
        %v1977 = vadd.f32 %v1961, %v1975
        %1978 = vset.pattern.permute.xlu0 37
        %1979 = vperm.xlu0 %1978, %v1387
        %v1980 = vpop.permute.xlu0 %1979
        %v1982 = vmul.f32 %v1980, %v1393
        %v1983 = vmul.f32 %v1980, %v1394
        %1986 = vrot.lane.b32.xlu0 %v1982, 37
        %v1987 = vpop.permute.xlu0 %1986
        %1988 = vrot.lane.b32.xlu0 %v1983, 37
        %v1989 = vpop.permute.xlu0 %1988
        %vm1990 = vcmask 302080
        %v1991 = vsel %vm1990, %v1987, %v1989
        %v1993 = vadd.f32 %v1977, %v1991
        %1994 = vset.pattern.permute.xlu0 38
        %1995 = vperm.xlu0 %1994, %v1387
        %v1996 = vpop.permute.xlu0 %1995
        %v1998 = vmul.f32 %v1996, %v1393
        %v1999 = vmul.f32 %v1996, %v1394
        %2002 = vrot.lane.b32.xlu0 %v1998, 38
        %v2003 = vpop.permute.xlu0 %2002
        %2004 = vrot.lane.b32.xlu0 %v1999, 38
        %v2005 = vpop.permute.xlu0 %2004
        %vm2006 = vcmask 310272
        %v2007 = vsel %vm2006, %v2003, %v2005
        %v2009 = vadd.f32 %v1993, %v2007
        %2010 = vset.pattern.permute.xlu0 39
        %2011 = vperm.xlu0 %2010, %v1387
        %v2012 = vpop.permute.xlu0 %2011
        %v2014 = vmul.f32 %v2012, %v1393
        %v2015 = vmul.f32 %v2012, %v1394
        %2018 = vrot.lane.b32.xlu0 %v2014, 39
        %v2019 = vpop.permute.xlu0 %2018
        %2020 = vrot.lane.b32.xlu0 %v2015, 39
        %v2021 = vpop.permute.xlu0 %2020
        %vm2022 = vcmask 318464
        %v2023 = vsel %vm2022, %v2019, %v2021
        %v2025 = vadd.f32 %v2009, %v2023
        %2026 = vset.pattern.permute.xlu0 40
        %2027 = vperm.xlu0 %2026, %v1387
        %v2028 = vpop.permute.xlu0 %2027
        %v2030 = vmul.f32 %v2028, %v1393
        %v2031 = vmul.f32 %v2028, %v1394
        %2034 = vrot.lane.b32.xlu0 %v2030, 40
        %v2035 = vpop.permute.xlu0 %2034
        %2036 = vrot.lane.b32.xlu0 %v2031, 40
        %v2037 = vpop.permute.xlu0 %2036
        %vm2038 = vcmask 326656
        %v2039 = vsel %vm2038, %v2035, %v2037
        %v2041 = vadd.f32 %v2025, %v2039
        %2042 = vset.pattern.permute.xlu0 41
        %2043 = vperm.xlu0 %2042, %v1387
        %v2044 = vpop.permute.xlu0 %2043
        %v2046 = vmul.f32 %v2044, %v1393
        %v2047 = vmul.f32 %v2044, %v1394
        %2050 = vrot.lane.b32.xlu0 %v2046, 41
        %v2051 = vpop.permute.xlu0 %2050
        %2052 = vrot.lane.b32.xlu0 %v2047, 41
        %v2053 = vpop.permute.xlu0 %2052
        %vm2054 = vcmask 334848
        %v2055 = vsel %vm2054, %v2051, %v2053
        %v2057 = vadd.f32 %v2041, %v2055
        %2058 = vset.pattern.permute.xlu0 42
        %2059 = vperm.xlu0 %2058, %v1387
        %v2060 = vpop.permute.xlu0 %2059
        %v2062 = vmul.f32 %v2060, %v1393
        %v2063 = vmul.f32 %v2060, %v1394
        %2066 = vrot.lane.b32.xlu0 %v2062, 42
        %v2067 = vpop.permute.xlu0 %2066
        %2068 = vrot.lane.b32.xlu0 %v2063, 42
        %v2069 = vpop.permute.xlu0 %2068
        %vm2070 = vcmask 343040
        %v2071 = vsel %vm2070, %v2067, %v2069
        %v2073 = vadd.f32 %v2057, %v2071
        %2074 = vset.pattern.permute.xlu0 43
        %2075 = vperm.xlu0 %2074, %v1387
        %v2076 = vpop.permute.xlu0 %2075
        %v2078 = vmul.f32 %v2076, %v1393
        %v2079 = vmul.f32 %v2076, %v1394
        %2082 = vrot.lane.b32.xlu0 %v2078, 43
        %v2083 = vpop.permute.xlu0 %2082
        %2084 = vrot.lane.b32.xlu0 %v2079, 43
        %v2085 = vpop.permute.xlu0 %2084
        %vm2086 = vcmask 351232
        %v2087 = vsel %vm2086, %v2083, %v2085
        %v2089 = vadd.f32 %v2073, %v2087
        %2090 = vset.pattern.permute.xlu0 44
        %2091 = vperm.xlu0 %2090, %v1387
        %v2092 = vpop.permute.xlu0 %2091
        %v2094 = vmul.f32 %v2092, %v1393
        %v2095 = vmul.f32 %v2092, %v1394
        %2098 = vrot.lane.b32.xlu0 %v2094, 44
        %v2099 = vpop.permute.xlu0 %2098
        %2100 = vrot.lane.b32.xlu0 %v2095, 44
        %v2101 = vpop.permute.xlu0 %2100
        %vm2102 = vcmask 359424
        %v2103 = vsel %vm2102, %v2099, %v2101
        %v2105 = vadd.f32 %v2089, %v2103
        %2106 = vset.pattern.permute.xlu0 45
        %2107 = vperm.xlu0 %2106, %v1387
        %v2108 = vpop.permute.xlu0 %2107
        %v2110 = vmul.f32 %v2108, %v1393
        %v2111 = vmul.f32 %v2108, %v1394
        %2114 = vrot.lane.b32.xlu0 %v2110, 45
        %v2115 = vpop.permute.xlu0 %2114
        %2116 = vrot.lane.b32.xlu0 %v2111, 45
        %v2117 = vpop.permute.xlu0 %2116
        %vm2118 = vcmask 367616
        %v2119 = vsel %vm2118, %v2115, %v2117
        %v2121 = vadd.f32 %v2105, %v2119
        %2122 = vset.pattern.permute.xlu0 46
        %2123 = vperm.xlu0 %2122, %v1387
        %v2124 = vpop.permute.xlu0 %2123
        %v2126 = vmul.f32 %v2124, %v1393
        %v2127 = vmul.f32 %v2124, %v1394
        %2130 = vrot.lane.b32.xlu0 %v2126, 46
        %v2131 = vpop.permute.xlu0 %2130
        %2132 = vrot.lane.b32.xlu0 %v2127, 46
        %v2133 = vpop.permute.xlu0 %2132
        %vm2134 = vcmask 375808
        %v2135 = vsel %vm2134, %v2131, %v2133
        %v2137 = vadd.f32 %v2121, %v2135
        %2138 = vset.pattern.permute.xlu0 47
        %2139 = vperm.xlu0 %2138, %v1387
        %v2140 = vpop.permute.xlu0 %2139
        %v2142 = vmul.f32 %v2140, %v1393
        %v2143 = vmul.f32 %v2140, %v1394
        %2146 = vrot.lane.b32.xlu0 %v2142, 47
        %v2147 = vpop.permute.xlu0 %2146
        %2148 = vrot.lane.b32.xlu0 %v2143, 47
        %v2149 = vpop.permute.xlu0 %2148
        %vm2150 = vcmask 384000
        %v2151 = vsel %vm2150, %v2147, %v2149
        %v2153 = vadd.f32 %v2137, %v2151
        %2154 = vset.pattern.permute.xlu0 48
        %2155 = vperm.xlu0 %2154, %v1387
        %v2156 = vpop.permute.xlu0 %2155
        %v2158 = vmul.f32 %v2156, %v1393
        %v2159 = vmul.f32 %v2156, %v1394
        %2162 = vrot.lane.b32.xlu0 %v2158, 48
        %v2163 = vpop.permute.xlu0 %2162
        %2164 = vrot.lane.b32.xlu0 %v2159, 48
        %v2165 = vpop.permute.xlu0 %2164
        %vm2166 = vcmask 392192
        %v2167 = vsel %vm2166, %v2163, %v2165
        %v2169 = vadd.f32 %v2153, %v2167
        %2170 = vset.pattern.permute.xlu0 49
        %2171 = vperm.xlu0 %2170, %v1387
        %v2172 = vpop.permute.xlu0 %2171
        %v2174 = vmul.f32 %v2172, %v1393
        %v2175 = vmul.f32 %v2172, %v1394
        %2178 = vrot.lane.b32.xlu0 %v2174, 49
        %v2179 = vpop.permute.xlu0 %2178
        %2180 = vrot.lane.b32.xlu0 %v2175, 49
        %v2181 = vpop.permute.xlu0 %2180
        %vm2182 = vcmask 400384
        %v2183 = vsel %vm2182, %v2179, %v2181
        %v2185 = vadd.f32 %v2169, %v2183
        %2186 = vset.pattern.permute.xlu0 50
        %2187 = vperm.xlu0 %2186, %v1387
        %v2188 = vpop.permute.xlu0 %2187
        %v2190 = vmul.f32 %v2188, %v1393
        %v2191 = vmul.f32 %v2188, %v1394
        %2194 = vrot.lane.b32.xlu0 %v2190, 50
        %v2195 = vpop.permute.xlu0 %2194
        %2196 = vrot.lane.b32.xlu0 %v2191, 50
        %v2197 = vpop.permute.xlu0 %2196
        %vm2198 = vcmask 408576
        %v2199 = vsel %vm2198, %v2195, %v2197
        %v2201 = vadd.f32 %v2185, %v2199
        %2202 = vset.pattern.permute.xlu0 51
        %2203 = vperm.xlu0 %2202, %v1387
        %v2204 = vpop.permute.xlu0 %2203
        %v2206 = vmul.f32 %v2204, %v1393
        %v2207 = vmul.f32 %v2204, %v1394
        %2210 = vrot.lane.b32.xlu0 %v2206, 51
        %v2211 = vpop.permute.xlu0 %2210
        %2212 = vrot.lane.b32.xlu0 %v2207, 51
        %v2213 = vpop.permute.xlu0 %2212
        %vm2214 = vcmask 416768
        %v2215 = vsel %vm2214, %v2211, %v2213
        %v2217 = vadd.f32 %v2201, %v2215
        %2218 = vset.pattern.permute.xlu0 52
        %2219 = vperm.xlu0 %2218, %v1387
        %v2220 = vpop.permute.xlu0 %2219
        %v2222 = vmul.f32 %v2220, %v1393
        %v2223 = vmul.f32 %v2220, %v1394
        %2226 = vrot.lane.b32.xlu0 %v2222, 52
        %v2227 = vpop.permute.xlu0 %2226
        %2228 = vrot.lane.b32.xlu0 %v2223, 52
        %v2229 = vpop.permute.xlu0 %2228
        %vm2230 = vcmask 424960
        %v2231 = vsel %vm2230, %v2227, %v2229
        %v2233 = vadd.f32 %v2217, %v2231
        %2234 = vset.pattern.permute.xlu0 53
        %2235 = vperm.xlu0 %2234, %v1387
        %v2236 = vpop.permute.xlu0 %2235
        %v2238 = vmul.f32 %v2236, %v1393
        %v2239 = vmul.f32 %v2236, %v1394
        %2242 = vrot.lane.b32.xlu0 %v2238, 53
        %v2243 = vpop.permute.xlu0 %2242
        %2244 = vrot.lane.b32.xlu0 %v2239, 53
        %v2245 = vpop.permute.xlu0 %2244
        %vm2246 = vcmask 433152
        %v2247 = vsel %vm2246, %v2243, %v2245
        %v2249 = vadd.f32 %v2233, %v2247
        %2250 = vset.pattern.permute.xlu0 54
        %2251 = vperm.xlu0 %2250, %v1387
        %v2252 = vpop.permute.xlu0 %2251
        %v2254 = vmul.f32 %v2252, %v1393
        %v2255 = vmul.f32 %v2252, %v1394
        %2258 = vrot.lane.b32.xlu0 %v2254, 54
        %v2259 = vpop.permute.xlu0 %2258
        %2260 = vrot.lane.b32.xlu0 %v2255, 54
        %v2261 = vpop.permute.xlu0 %2260
        %vm2262 = vcmask 441344
        %v2263 = vsel %vm2262, %v2259, %v2261
        %v2265 = vadd.f32 %v2249, %v2263
        %2266 = vset.pattern.permute.xlu0 55
        %2267 = vperm.xlu0 %2266, %v1387
        %v2268 = vpop.permute.xlu0 %2267
        %v2270 = vmul.f32 %v2268, %v1393
        %v2271 = vmul.f32 %v2268, %v1394
        %2274 = vrot.lane.b32.xlu0 %v2270, 55
        %v2275 = vpop.permute.xlu0 %2274
        %2276 = vrot.lane.b32.xlu0 %v2271, 55
        %v2277 = vpop.permute.xlu0 %2276
        %vm2278 = vcmask 449536
        %v2279 = vsel %vm2278, %v2275, %v2277
        %v2281 = vadd.f32 %v2265, %v2279
        %2282 = vset.pattern.permute.xlu0 56
        %2283 = vperm.xlu0 %2282, %v1387
        %v2284 = vpop.permute.xlu0 %2283
        %v2286 = vmul.f32 %v2284, %v1393
        %v2287 = vmul.f32 %v2284, %v1394
        %2290 = vrot.lane.b32.xlu0 %v2286, 56
        %v2291 = vpop.permute.xlu0 %2290
        %2292 = vrot.lane.b32.xlu0 %v2287, 56
        %v2293 = vpop.permute.xlu0 %2292
        %vm2294 = vcmask 457728
        %v2295 = vsel %vm2294, %v2291, %v2293
        %v2297 = vadd.f32 %v2281, %v2295
        %2298 = vset.pattern.permute.xlu0 57
        %2299 = vperm.xlu0 %2298, %v1387
        %v2300 = vpop.permute.xlu0 %2299
        %v2302 = vmul.f32 %v2300, %v1393
        %v2303 = vmul.f32 %v2300, %v1394
        %2306 = vrot.lane.b32.xlu0 %v2302, 57
        %v2307 = vpop.permute.xlu0 %2306
        %2308 = vrot.lane.b32.xlu0 %v2303, 57
        %v2309 = vpop.permute.xlu0 %2308
        %vm2310 = vcmask 465920
        %v2311 = vsel %vm2310, %v2307, %v2309
        %v2313 = vadd.f32 %v2297, %v2311
        %2314 = vset.pattern.permute.xlu0 58
        %2315 = vperm.xlu0 %2314, %v1387
        %v2316 = vpop.permute.xlu0 %2315
        %v2318 = vmul.f32 %v2316, %v1393
        %v2319 = vmul.f32 %v2316, %v1394
        %2322 = vrot.lane.b32.xlu0 %v2318, 58
        %v2323 = vpop.permute.xlu0 %2322
        %2324 = vrot.lane.b32.xlu0 %v2319, 58
        %v2325 = vpop.permute.xlu0 %2324
        %vm2326 = vcmask 474112
        %v2327 = vsel %vm2326, %v2323, %v2325
        %v2329 = vadd.f32 %v2313, %v2327
        %2330 = vset.pattern.permute.xlu0 59
        %2331 = vperm.xlu0 %2330, %v1387
        %v2332 = vpop.permute.xlu0 %2331
        %v2334 = vmul.f32 %v2332, %v1393
        %v2335 = vmul.f32 %v2332, %v1394
        %2338 = vrot.lane.b32.xlu0 %v2334, 59
        %v2339 = vpop.permute.xlu0 %2338
        %2340 = vrot.lane.b32.xlu0 %v2335, 59
        %v2341 = vpop.permute.xlu0 %2340
        %vm2342 = vcmask 482304
        %v2343 = vsel %vm2342, %v2339, %v2341
        %v2345 = vadd.f32 %v2329, %v2343
        %2346 = vset.pattern.permute.xlu0 60
        %2347 = vperm.xlu0 %2346, %v1387
        %v2348 = vpop.permute.xlu0 %2347
        %v2350 = vmul.f32 %v2348, %v1393
        %v2351 = vmul.f32 %v2348, %v1394
        %2354 = vrot.lane.b32.xlu0 %v2350, 60
        %v2355 = vpop.permute.xlu0 %2354
        %2356 = vrot.lane.b32.xlu0 %v2351, 60
        %v2357 = vpop.permute.xlu0 %2356
        %vm2358 = vcmask 490496
        %v2359 = vsel %vm2358, %v2355, %v2357
        %v2361 = vadd.f32 %v2345, %v2359
        %2362 = vset.pattern.permute.xlu0 61
        %2363 = vperm.xlu0 %2362, %v1387
        %v2364 = vpop.permute.xlu0 %2363
        %v2366 = vmul.f32 %v2364, %v1393
        %v2367 = vmul.f32 %v2364, %v1394
        %2370 = vrot.lane.b32.xlu0 %v2366, 61
        %v2371 = vpop.permute.xlu0 %2370
        %2372 = vrot.lane.b32.xlu0 %v2367, 61
        %v2373 = vpop.permute.xlu0 %2372
        %vm2374 = vcmask 498688
        %v2375 = vsel %vm2374, %v2371, %v2373
        %v2377 = vadd.f32 %v2361, %v2375
        %2378 = vset.pattern.permute.xlu0 62
        %2379 = vperm.xlu0 %2378, %v1387
        %v2380 = vpop.permute.xlu0 %2379
        %v2382 = vmul.f32 %v2380, %v1393
        %v2383 = vmul.f32 %v2380, %v1394
        %2386 = vrot.lane.b32.xlu0 %v2382, 62
        %v2387 = vpop.permute.xlu0 %2386
        %2388 = vrot.lane.b32.xlu0 %v2383, 62
        %v2389 = vpop.permute.xlu0 %2388
        %vm2390 = vcmask 506880
        %v2391 = vsel %vm2390, %v2387, %v2389
        %v2393 = vadd.f32 %v2377, %v2391
        %2394 = vset.pattern.permute.xlu0 63
        %2395 = vperm.xlu0 %2394, %v1387
        %v2396 = vpop.permute.xlu0 %2395
        %v2398 = vmul.f32 %v2396, %v1393
        %v2399 = vmul.f32 %v2396, %v1394
        %2402 = vrot.lane.b32.xlu0 %v2398, 63
        %v2403 = vpop.permute.xlu0 %2402
        %2404 = vrot.lane.b32.xlu0 %v2399, 63
        %v2405 = vpop.permute.xlu0 %2404
        %vm2406 = vcmask 515072
        %v2407 = vsel %vm2406, %v2403, %v2405
        %v2409 = vadd.f32 %v2393, %v2407
        %2410 = vst [vmem:[%s330] sm:$0xff] %v2409
        %s2411 = sand.u32 %s186, 1
        %s2412 = scalar_lea.sflag [#allocation5], %s2411
        %s2413 = sand.u32 %s186, 1
        %s2414 = smul.addr %s2413, 8
        %s2415 = scalar_lea.vmem [#allocation12], %s2414
        // Predicated region
        $region69: #{tpu_custom_call.1} parent=43 // pred_check
          %p2416 = pneg %p196
        $region70: #{tpu_custom_call.1} parent=43 // pred_check_branch
          %2418 = sbr.rel (%p2416) target = $region72
        $region71: #{tpu_custom_call.1} parent=43 // pred_region
          %s2420 = ssub.s32 128, 128
          %2421 = vsyncadd %s2412, %s2420
          %s2422 = smul.addr %s27, 3
          %s2423 = sadd.s32 %s28, %s2422
          %s2424 = smul.addr %s2423, 128
          %s2425 = scalar_lea.hbm %s6, %s2424
          %s2427 = sshll.u32 %s2415, 4
          %s2428 = int_to_ptr.vmem [resolvable:$true] %s2427
          %2430 = dma.vmem_to_hbm [thread:$0]  %s2428, 128, %s2425, %s2412
        $region72: #{tpu_custom_call.1} parent=43 // pred_fallthru
          _
      $region44: #{tpu_custom_call.1} parent=5 // pred_fallthru
        _
      %p2431 = scmp.le.s32.totalorder 2, %s18
      // Predicated region
      $region73: #{tpu_custom_call.1} parent=5 // pred_check
        %p2432 = pneg %p2431
      $region74: #{tpu_custom_call.1} parent=5 // pred_check_branch
        %2434 = sbr.rel (%p2432) target = $region76
      $region75: #{tpu_custom_call.1} parent=5 // pred_region
        %s2435 = ssub.s32 %s18, 2
        // Predicated region
        $region77: #{tpu_custom_call.1} parent=75 // pred_check
          %p2436 = pneg %p202
        $region78: #{tpu_custom_call.1} parent=75 // pred_check_branch
          %2438 = sbr.rel (%p2436) target = $region80
        $region79: #{tpu_custom_call.1} parent=75 // pred_region
          %s2439 = sand.u32 %s187, 1
          %s2440 = scalar_lea.sflag [#allocation5], %s2439
          %s2441 = sand.u32 %s187, 1
          %s2442 = smul.addr %s2441, 8
          %s2443 = scalar_lea.vmem [#allocation12], %s2442
          %2444 = dma.done %s2440, 128
        $region80: #{tpu_custom_call.1} parent=75 // pred_fallthru
          _
      $region76: #{tpu_custom_call.1} parent=5 // pred_fallthru
        _
    $region6: #{tpu_custom_call.1} parent=1 // loop_footer
      %s22 = sadd.s32 1, %s18
    $region7: #{tpu_custom_call.1} parent=1 // loop_footer_branch
      %17 = sbr.rel target = $region3
    $region8: #{tpu_custom_call.1} parent=1 // loop_exit
      _
    %2445 = vsyncpa [#allocation4], 1
    %s2446 = scalar_lea.sflag [#allocation4], 1
    %2447 = vsyncpa %s2446, 1
    %2448 = vsyncpa [#allocation7], 1
    %2449 = vsyncpa [#allocation10], 1
    %2450 = vsyncpa [#allocation5], 1
    %s2451 = scalar_lea.sflag [#allocation5], 1
    %2452 = vsyncpa %s2451, 1

</llo_original>
